<compile_context>
chip_gen: v5e
topology: v5e:2x2
jax: 0.10.0
libtpu: 0.0.40
codegen_flags: <defaults>
</compile_context>

<pallas_src>
import math
import jax
import jax.numpy as jnp
from jax.experimental import pallas as pl
from jax.experimental.pallas import tpu as pltpu


def _attn_kernel(xq_ref, xkv_ref, wq_ref, wkv_ref, wo_ref,
                 cos_q_ref, sin_q_ref, cos_k_ref, sin_k_ref,
                 o_ref,
                 q_s, acc_s, m_s, l_s):
    qi = pl.program_id(1)
    kv = pl.program_id(2)
    n_kv = pl.num_programs(2)

    tq, C = q_s.shape
    H, _, D = acc_s.shape
    tk = xkv_ref.shape[1]
    d2 = D // 2

    def rotate_half(t):
        # concat([t2, t1]) along lanes; use the XLU roll when the head dim is lane-aligned.
        if D % 128 == 0:
            return pltpu.roll(t, d2, axis=-1)
        return jnp.concatenate([t[:, d2:], t[:, :d2]], axis=-1)

    def rope(t, cos, sin_signed):          # f32 elementwise; full-width (rows, D) tables
        return t * cos + rotate_half(t) * sin_signed

    # ---- new Q-row tile: project Q for all heads at once (full-width MXU matmul),
    #      apply RoPE (scale already folded into wq), reset online-softmax state.
    @pl.when(kv == 0)
    def _init():
        q_all = jnp.dot(xq_ref[0], wq_ref[...],                 # bf16 x bf16 -> f32
                        preferred_element_type=jnp.float32)     # (tq, C)
        cos = cos_q_ref[...]
        sin = sin_q_ref[...]
        q_s[...] = jnp.concatenate(
            [rope(q_all[:, h * D:(h + 1) * D], cos, sin) for h in range(H)],
            axis=-1).astype(q_s.dtype)
        m_s[...] = jnp.full(m_s.shape, -1e30, m_s.dtype)        # finite: no inf-inf NaNs
        l_s[...] = jnp.zeros_like(l_s)
        acc_s[...] = jnp.zeros_like(acc_s)

    # ---- causal skip: KV tiles entirely above the diagonal contribute nothing.
    @pl.when(kv * tk <= qi * tq + (tq - 1))
    def _tile():
        kv_all = jnp.dot(xkv_ref[0], wkv_ref[...],              # (tk, 2C) = [K | V], all heads
                         preferred_element_type=jnp.float32)
        cos = cos_k_ref[...]
        sin = sin_k_ref[...]
        row = qi * tq + jax.lax.broadcasted_iota(jnp.int32, (tq, tk), 0)
        col = kv * tk + jax.lax.broadcasted_iota(jnp.int32, (tq, tk), 1)
        causal = row >= col                                     # built once per tile

        for h in range(H):                                      # static unroll over heads
            k_h = rope(kv_all[:, h * D:(h + 1) * D], cos, sin).astype(jnp.bfloat16)
            v_h = kv_all[:, C + h * D:C + (h + 1) * D].astype(jnp.bfloat16)
            q_h = q_s[:, h * D:(h + 1) * D]                     # (tq, D) bf16, pre-scaled

            s = jax.lax.dot_general(q_h, k_h, (((1,), (1,)), ((), ())),
                                    preferred_element_type=jnp.float32)   # (tq, tk) f32
            s = jnp.where(causal, s, -1e30)

            m_prev = m_s[h]
            m_new = jnp.maximum(m_prev, jnp.max(s, axis=-1, keepdims=True))
            alpha = jnp.exp(m_prev - m_new)
            p = jnp.exp(s - m_new)                              # unnormalized
            l_s[h] = alpha * l_s[h] + jnp.sum(p, axis=-1, keepdims=True)
            acc_s[h] = alpha * acc_s[h] + jnp.dot(
                p.astype(jnp.bfloat16), v_h, preferred_element_type=jnp.float32)
            m_s[h] = m_new

    # ---- last KV tile: deferred normalization + single wide (tq,C)@(C,C) projection.
    @pl.when(kv == n_kv - 1)
    def _finalize():
        y = jnp.concatenate(
            [acc_s[h] * pl.reciprocal(l_s[h], approx=True) for h in range(H)],
            axis=-1).astype(jnp.bfloat16)                       # (tq, C)
        o_ref[0] = jnp.dot(y, wo_ref[...],
                           preferred_element_type=jnp.float32).astype(o_ref.dtype)


def causal_self_attention(x, w_attn, w_proj, n_head, *, block_q=128, block_k=128):
    """x: (B, T, C) f32; w_attn: (3C, C) (c_attn.weight); w_proj: (C, C) (c_proj.weight)."""
    B, T, C = x.shape
    H = n_head
    assert C % H == 0
    D = C // H
    assert D % 2 == 0

    tq = block_q if T % block_q == 0 else T
    tk = block_k if T % block_k == 0 else T
    assert T % tq == 0 and T % tk == 0

    # Weights: [q | k | v] column blocks of w_attn.T; 1/sqrt(D) folded into the Q block;
    # everything cast to bf16 (MXU operands; accumulation stays f32 in-kernel).
    w_t = w_attn.T                                                     # (C, 3C)
    w_q = (w_t[:, :C] * (1.0 / math.sqrt(D))).astype(jnp.bfloat16)     # (C, C)
    w_kv = w_t[:, C:].astype(jnp.bfloat16)                             # (C, 2C) = [K | V]
    w_o = w_proj.T.astype(jnp.bfloat16)                                # (C, C): y @ w_proj.T

    # Full-width rotary tables: rope(t) = t * cos_f + rotate_half(t) * sin_f.
    inv_freq = 1.0 / (10000.0 ** (jnp.arange(0, D, 2, dtype=jnp.float32) / D))
    pos = jnp.arange(T, dtype=jnp.float32)
    freqs = jnp.outer(pos, inv_freq)                                   # (T, D//2)
    cos_f = jnp.concatenate([jnp.cos(freqs), jnp.cos(freqs)], axis=-1)   # (T, D)
    sin_f = jnp.concatenate([jnp.sin(freqs), -jnp.sin(freqs)], axis=-1)  # (T, D)

    x_bf = x.astype(jnp.bfloat16)

    grid = (B, T // tq, T // tk)
    grid_spec = pltpu.PrefetchScalarGridSpec(
        num_scalar_prefetch=0,
        grid=grid,
        in_specs=[
            pl.BlockSpec((1, tq, C), lambda b, qi, kv: (b, qi, 0)),    # x rows for Q
            pl.BlockSpec((1, tk, C), lambda b, qi, kv: (b, kv, 0)),    # x rows for K/V
            pl.BlockSpec((C, C), lambda b, qi, kv: (0, 0)),            # W_q (scaled)
            pl.BlockSpec((C, 2 * C), lambda b, qi, kv: (0, 0)),        # W_k | W_v
            pl.BlockSpec((C, C), lambda b, qi, kv: (0, 0)),            # W_out (= w_proj.T)
            pl.BlockSpec((tq, D), lambda b, qi, kv: (qi, 0)),          # cos (Q rows)
            pl.BlockSpec((tq, D), lambda b, qi, kv: (qi, 0)),          # sin (Q rows)
            pl.BlockSpec((tk, D), lambda b, qi, kv: (kv, 0)),          # cos (K rows)
            pl.BlockSpec((tk, D), lambda b, qi, kv: (kv, 0)),          # sin (K rows)
        ],
        out_specs=pl.BlockSpec((1, tq, C), lambda b, qi, kv: (b, qi, 0)),
        scratch_shapes=[
            pltpu.VMEM((tq, C), jnp.bfloat16),     # rotated, pre-scaled Q (all heads)
            pltpu.VMEM((H, tq, D), jnp.float32),   # unnormalized attention accumulators
            pltpu.VMEM((H, tq, 1), jnp.float32),   # running max
            pltpu.VMEM((H, tq, 1), jnp.float32),   # running sum
        ],
    )

    return pl.pallas_call(
        _attn_kernel,
        out_shape=jax.ShapeDtypeStruct((B, T, C), jnp.float32),
        grid_spec=grid_spec,
        compiler_params=pltpu.CompilerParams(
            dimension_semantics=("parallel", "parallel", "arbitrary"),
            vmem_limit_bytes=48 * 1024 * 1024),
    )(x_bf, x_bf, w_q, w_kv, w_o, cos_f, sin_f, cos_f, sin_f)


def reference(x, w_attn, w_proj, n_head):
    """Pure-JAX f32 transcription of the PyTorch forward pass (ground truth)."""
    B, T, C = x.shape
    H = n_head
    D = C // H
    hp = jax.lax.Precision.HIGHEST
    qkv = jnp.dot(x, w_attn.T, precision=hp)
    q, k, v = jnp.split(qkv, 3, axis=2)
    q = q.reshape(B, T, H, D)
    k = k.reshape(B, T, H, D)
    v = v.reshape(B, T, H, D)

    inv_freq = 1.0 / (10000.0 ** (jnp.arange(0, D, 2, dtype=jnp.float32) / D))
    t = jnp.arange(T, dtype=jnp.float32)
    freqs = jnp.outer(t, inv_freq)
    cos = jnp.cos(freqs)[None, :, None, :]
    sin = jnp.sin(freqs)[None, :, None, :]

    def rope(a):
        d = a.shape[3] // 2
        a1, a2 = a[..., :d], a[..., d:]
        return jnp.concatenate([a1 * cos + a2 * sin, -a1 * sin + a2 * cos], axis=3)

    q = rope(q)
    k = rope(k)
    q = q.transpose(0, 2, 1, 3)
    k = k.transpose(0, 2, 1, 3)
    v = v.transpose(0, 2, 1, 3)

    s = jnp.einsum("bhqd,bhkd->bhqk", q, k, precision=hp) / math.sqrt(D)
    mask = jnp.tril(jnp.ones((T, T), dtype=bool))
    s = jnp.where(mask[None, None], s, -jnp.inf)
    p = jax.nn.softmax(s, axis=-1)
    y = jnp.einsum("bhqk,bhkd->bhqd", p, v, precision=hp)
    y = y.transpose(0, 2, 1, 3).reshape(B, T, C)
    return jnp.dot(y, w_proj.T, precision=hp)


if __name__ == "__main__":
    B, T, C, H = 2, 8, 32, 4   # batch=2, seq=8, n_embd=32, n_head=4 (head_dim=8)

    key = jax.random.PRNGKey(0)
    kx, ka, kp = jax.random.split(key, 3)
    x = jax.random.normal(kx, (B, T, C), dtype=jnp.float32)
    w_attn = 0.02 * jax.random.normal(ka, (3 * C, C), dtype=jnp.float32)  # c_attn.weight
    w_proj = 0.02 * jax.random.normal(kp, (C, C), dtype=jnp.float32)      # c_proj.weight

    out = jax.block_until_ready(causal_self_attention(x, w_attn, w_proj, H))
    ref = reference(x, w_attn, w_proj, H)

    assert out.shape == (B, T, C)
    err = float(jnp.max(jnp.abs(out - ref)))
    tol = 2e-3 + 2e-2 * float(jnp.max(jnp.abs(ref)))   # bf16-MXU / approx-reciprocal tolerance
    assert err <= tol, (err, tol)
    print("KERNEL_OK")
</pallas_src>

<mosaic_0001>
module attributes {stable_mosaic.version = 11 : i64} {
  func.func @_attn_kernel(%arg0: i32, %arg1: i32, %arg2: i32, %arg3: memref<1x8x32xbf16, #tpu.memory_space<vmem>>, %arg4: memref<1x8x32xbf16, #tpu.memory_space<vmem>>, %arg5: memref<32x32xbf16, #tpu.memory_space<vmem>>, %arg6: memref<32x64xbf16, #tpu.memory_space<vmem>>, %arg7: memref<32x32xbf16, #tpu.memory_space<vmem>>, %arg8: memref<8x8xf32, #tpu.memory_space<vmem>>, %arg9: memref<8x8xf32, #tpu.memory_space<vmem>>, %arg10: memref<8x8xf32, #tpu.memory_space<vmem>>, %arg11: memref<8x8xf32, #tpu.memory_space<vmem>>, %arg12: memref<1x8x32xf32, #tpu.memory_space<vmem>>, %arg13: memref<8x32xbf16, #tpu.memory_space<vmem>>, %arg14: memref<4x8x8xf32, #tpu.memory_space<vmem>>, %arg15: memref<4x8x1xf32, #tpu.memory_space<vmem>>, %arg16: memref<4x8x1xf32, #tpu.memory_space<vmem>>) attributes {dimension_semantics = [#tpu.dimension_semantics<parallel>, #tpu.dimension_semantics<parallel>, #tpu.dimension_semantics<arbitrary>], iteration_bounds = array<i64: 2, 1, 1>, scalar_prefetch = 0 : i64, scratch_operands = 4 : i64, tpu.core_type = #tpu.core_type<tc>, window_params = [{transform_indices = @transform_0, window_bounds = array<i64: 1, 8, 32>}, {transform_indices = @transform_1, window_bounds = array<i64: 1, 8, 32>}, {pipeline_mode = #tpu.pipeline_mode<synchronous>, transform_indices = @transform_2, window_bounds = array<i64: 32, 32>}, {pipeline_mode = #tpu.pipeline_mode<synchronous>, transform_indices = @transform_3, window_bounds = array<i64: 32, 64>}, {pipeline_mode = #tpu.pipeline_mode<synchronous>, transform_indices = @transform_4, window_bounds = array<i64: 32, 32>}, {transform_indices = @transform_5, window_bounds = array<i64: 8, 8>}, {transform_indices = @transform_6, window_bounds = array<i64: 8, 8>}, {transform_indices = @transform_7, window_bounds = array<i64: 8, 8>}, {transform_indices = @transform_8, window_bounds = array<i64: 8, 8>}, {transform_indices = @transform_9, window_bounds = array<i64: 1, 8, 32>}]} {
    %c0_i32 = arith.constant 0 : i32
    %0 = arith.cmpi eq, %arg2, %c0_i32 : i32
    %1 = arith.extui %0 : i1 to i32
    %c0_i32_0 = arith.constant 0 : i32
    %2 = arith.cmpi ne, %1, %c0_i32_0 : i32
    scf.if %2 {
      %c0 = arith.constant 0 : index
      %c0_5 = arith.constant 0 : index
      %c0_6 = arith.constant 0 : index
      %12 = vector.load %arg3[%c0, %c0_5, %c0_6] : memref<1x8x32xbf16, #tpu.memory_space<vmem>>, vector<1x8x32xbf16>
      %13 = vector.shape_cast %12 : vector<1x8x32xbf16> to vector<8x32xbf16>
      %c0_7 = arith.constant 0 : index
      %c0_8 = arith.constant 0 : index
      %14 = vector.load %arg5[%c0_7, %c0_8] : memref<32x32xbf16, #tpu.memory_space<vmem>>, vector<32x32xbf16>
      %cst = arith.constant dense<0.000000e+00> : vector<8x32xf32>
      %15 = tpu.matmul %13, %14, %cst {dimension_numbers = #tpu.dot_dimension_numbers<[1], [0], [0], [1], [0, 0, 1, 1], [], []>} : vector<8x32xbf16>, vector<32x32xbf16>, vector<8x32xf32> -> vector<8x32xf32>
      %c0_9 = arith.constant 0 : index
      %c0_10 = arith.constant 0 : index
      %16 = vector.load %arg8[%c0_9, %c0_10] : memref<8x8xf32, #tpu.memory_space<vmem>>, vector<8x8xf32>
      %c0_11 = arith.constant 0 : index
      %c0_12 = arith.constant 0 : index
      %17 = vector.load %arg9[%c0_11, %c0_12] : memref<8x8xf32, #tpu.memory_space<vmem>>, vector<8x8xf32>
      %18 = vector.extract_strided_slice %15 {offsets = [0, 0], sizes = [8, 8], strides = [1, 1]} : vector<8x32xf32> to vector<8x8xf32>
      %19 = arith.mulf %18, %16 : vector<8x8xf32>
      %20 = vector.extract_strided_slice %18 {offsets = [0, 4], sizes = [8, 4], strides = [1, 1]} : vector<8x8xf32> to vector<8x4xf32>
      %21 = vector.extract_strided_slice %18 {offsets = [0, 0], sizes = [8, 4], strides = [1, 1]} : vector<8x8xf32> to vector<8x4xf32>
      %22 = tpu.concatenate %20, %21 in 1 : vector<8x4xf32>, vector<8x4xf32> -> vector<8x8xf32>
      %23 = arith.mulf %22, %17 : vector<8x8xf32>
      %24 = arith.addf %19, %23 : vector<8x8xf32>
      %25 = vector.extract_strided_slice %15 {offsets = [0, 8], sizes = [8, 8], strides = [1, 1]} : vector<8x32xf32> to vector<8x8xf32>
      %26 = arith.mulf %25, %16 : vector<8x8xf32>
      %27 = vector.extract_strided_slice %25 {offsets = [0, 4], sizes = [8, 4], strides = [1, 1]} : vector<8x8xf32> to vector<8x4xf32>
      %28 = vector.extract_strided_slice %25 {offsets = [0, 0], sizes = [8, 4], strides = [1, 1]} : vector<8x8xf32> to vector<8x4xf32>
      %29 = tpu.concatenate %27, %28 in 1 : vector<8x4xf32>, vector<8x4xf32> -> vector<8x8xf32>
      %30 = arith.mulf %29, %17 : vector<8x8xf32>
      %31 = arith.addf %26, %30 : vector<8x8xf32>
      %32 = vector.extract_strided_slice %15 {offsets = [0, 16], sizes = [8, 8], strides = [1, 1]} : vector<8x32xf32> to vector<8x8xf32>
      %33 = arith.mulf %32, %16 : vector<8x8xf32>
      %34 = vector.extract_strided_slice %32 {offsets = [0, 4], sizes = [8, 4], strides = [1, 1]} : vector<8x8xf32> to vector<8x4xf32>
      %35 = vector.extract_strided_slice %32 {offsets = [0, 0], sizes = [8, 4], strides = [1, 1]} : vector<8x8xf32> to vector<8x4xf32>
      %36 = tpu.concatenate %34, %35 in 1 : vector<8x4xf32>, vector<8x4xf32> -> vector<8x8xf32>
      %37 = arith.mulf %36, %17 : vector<8x8xf32>
      %38 = arith.addf %33, %37 : vector<8x8xf32>
      %39 = vector.extract_strided_slice %15 {offsets = [0, 24], sizes = [8, 8], strides = [1, 1]} : vector<8x32xf32> to vector<8x8xf32>
      %40 = arith.mulf %39, %16 : vector<8x8xf32>
      %41 = vector.extract_strided_slice %39 {offsets = [0, 4], sizes = [8, 4], strides = [1, 1]} : vector<8x8xf32> to vector<8x4xf32>
      %42 = vector.extract_strided_slice %39 {offsets = [0, 0], sizes = [8, 4], strides = [1, 1]} : vector<8x8xf32> to vector<8x4xf32>
      %43 = tpu.concatenate %41, %42 in 1 : vector<8x4xf32>, vector<8x4xf32> -> vector<8x8xf32>
      %44 = arith.mulf %43, %17 : vector<8x8xf32>
      %45 = arith.addf %40, %44 : vector<8x8xf32>
      %46 = tpu.concatenate %24, %31, %38, %45 in 1 : vector<8x8xf32>, vector<8x8xf32>, vector<8x8xf32>, vector<8x8xf32> -> vector<8x32xf32>
      %47 = arith.truncf %46 : vector<8x32xf32> to vector<8x32xbf16>
      %c0_13 = arith.constant 0 : index
      %c0_14 = arith.constant 0 : index
      %48 = vector.load %arg13[%c0_13, %c0_14] : memref<8x32xbf16, #tpu.memory_space<vmem>>, vector<8x32xbf16>
      tpu.vector_store %arg13[%c0_13, %c0_14], %47 {strides = array<i32>} : memref<8x32xbf16, #tpu.memory_space<vmem>>, vector<8x32xbf16>,
      %cst_15 = arith.constant -1.000000e+30 : f32
      %49 = vector.broadcast %cst_15 : f32 to vector<4x8x1xf32>
      %c0_16 = arith.constant 0 : index
      %c0_17 = arith.constant 0 : index
      %c0_18 = arith.constant 0 : index
      %50 = vector.load %arg15[%c0_16, %c0_17, %c0_18] : memref<4x8x1xf32, #tpu.memory_space<vmem>>, vector<4x8x1xf32>
      tpu.vector_store %arg15[%c0_16, %c0_17, %c0_18], %49 {strides = array<i32>} : memref<4x8x1xf32, #tpu.memory_space<vmem>>, vector<4x8x1xf32>,
      %cst_19 = arith.constant 0.000000e+00 : f32
      %51 = vector.broadcast %cst_19 : f32 to vector<4x8x1xf32>
      %c0_20 = arith.constant 0 : index
      %c0_21 = arith.constant 0 : index
      %c0_22 = arith.constant 0 : index
      %52 = vector.load %arg16[%c0_20, %c0_21, %c0_22] : memref<4x8x1xf32, #tpu.memory_space<vmem>>, vector<4x8x1xf32>
      tpu.vector_store %arg16[%c0_20, %c0_21, %c0_22], %51 {strides = array<i32>} : memref<4x8x1xf32, #tpu.memory_space<vmem>>, vector<4x8x1xf32>,
      %cst_23 = arith.constant 0.000000e+00 : f32
      %53 = vector.broadcast %cst_23 : f32 to vector<4x8x8xf32>
      %c0_24 = arith.constant 0 : index
      %c0_25 = arith.constant 0 : index
      %c0_26 = arith.constant 0 : index
      %54 = vector.load %arg14[%c0_24, %c0_25, %c0_26] : memref<4x8x8xf32, #tpu.memory_space<vmem>>, vector<4x8x8xf32>
      tpu.vector_store %arg14[%c0_24, %c0_25, %c0_26], %53 {strides = array<i32>} : memref<4x8x8xf32, #tpu.memory_space<vmem>>, vector<4x8x8xf32>,
    } else {
    }
    %c8_i32 = arith.constant 8 : i32
    %3 = arith.muli %arg2, %c8_i32 : i32
    %c8_i32_1 = arith.constant 8 : i32
    %4 = arith.muli %arg1, %c8_i32_1 : i32
    %c7_i32 = arith.constant 7 : i32
    %5 = arith.addi %4, %c7_i32 : i32
    %6 = arith.cmpi sle, %3, %5 : i32
    %7 = arith.extui %6 : i1 to i32
    %c0_i32_2 = arith.constant 0 : i32
    %8 = arith.cmpi ne, %7, %c0_i32_2 : i32
    scf.if %8 {
      %c0 = arith.constant 0 : index
      %c0_5 = arith.constant 0 : index
      %c0_6 = arith.constant 0 : index
      %12 = vector.load %arg4[%c0, %c0_5, %c0_6] : memref<1x8x32xbf16, #tpu.memory_space<vmem>>, vector<1x8x32xbf16>
      %13 = vector.shape_cast %12 : vector<1x8x32xbf16> to vector<8x32xbf16>
      %c0_7 = arith.constant 0 : index
      %c0_8 = arith.constant 0 : index
      %14 = vector.load %arg6[%c0_7, %c0_8] : memref<32x64xbf16, #tpu.memory_space<vmem>>, vector<32x64xbf16>
      %cst = arith.constant dense<0.000000e+00> : vector<8x64xf32>
      %15 = tpu.matmul %13, %14, %cst {dimension_numbers = #tpu.dot_dimension_numbers<[1], [0], [0], [1], [0, 0, 1, 1], [], []>} : vector<8x32xbf16>, vector<32x64xbf16>, vector<8x64xf32> -> vector<8x64xf32>
      %c0_9 = arith.constant 0 : index
      %c0_10 = arith.constant 0 : index
      %16 = vector.load %arg10[%c0_9, %c0_10] : memref<8x8xf32, #tpu.memory_space<vmem>>, vector<8x8xf32>
      %c0_11 = arith.constant 0 : index
      %c0_12 = arith.constant 0 : index
      %17 = vector.load %arg11[%c0_11, %c0_12] : memref<8x8xf32, #tpu.memory_space<vmem>>, vector<8x8xf32>
      %c8_i32_13 = arith.constant 8 : i32
      %18 = arith.muli %arg1, %c8_i32_13 : i32
      %19 = tpu.iota {dimensions = array<i32: 0>} : vector<8x8xi32>
      %20 = vector.broadcast %18 : i32 to vector<8x8xi32>
      %21 = arith.addi %20, %19 : vector<8x8xi32>
      %c8_i32_14 = arith.constant 8 : i32
      %22 = arith.muli %arg2, %c8_i32_14 : i32
      %23 = tpu.iota {dimensions = array<i32: 1>} : vector<8x8xi32>
      %24 = vector.broadcast %22 : i32 to vector<8x8xi32>
      %25 = arith.addi %24, %23 : vector<8x8xi32>
      %26 = arith.cmpi sge, %21, %25 : vector<8x8xi32>
      %27 = vector.extract_strided_slice %15 {offsets = [0, 0], sizes = [8, 8], strides = [1, 1]} : vector<8x64xf32> to vector<8x8xf32>
      %28 = arith.mulf %27, %16 : vector<8x8xf32>
      %29 = vector.extract_strided_slice %27 {offsets = [0, 4], sizes = [8, 4], strides = [1, 1]} : vector<8x8xf32> to vector<8x4xf32>
      %30 = vector.extract_strided_slice %27 {offsets = [0, 0], sizes = [8, 4], strides = [1, 1]} : vector<8x8xf32> to vector<8x4xf32>
      %31 = tpu.concatenate %29, %30 in 1 : vector<8x4xf32>, vector<8x4xf32> -> vector<8x8xf32>
      %32 = arith.mulf %31, %17 : vector<8x8xf32>
      %33 = arith.addf %28, %32 : vector<8x8xf32>
      %34 = arith.truncf %33 : vector<8x8xf32> to vector<8x8xbf16>
      %35 = vector.extract_strided_slice %15 {offsets = [0, 32], sizes = [8, 8], strides = [1, 1]} : vector<8x64xf32> to vector<8x8xf32>
      %36 = arith.truncf %35 : vector<8x8xf32> to vector<8x8xbf16>
      %c0_15 = arith.constant 0 : index
      %c0_16 = arith.constant 0 : index
      %37 = vector.load %arg13[%c0_15, %c0_16] : memref<8x32xbf16, #tpu.memory_space<vmem>>, vector<8x8xbf16>
      %cst_17 = arith.constant dense<0.000000e+00> : vector<8x8xf32>
      %38 = tpu.matmul %37, %34, %cst_17 {dimension_numbers = #tpu.dot_dimension_numbers<[1], [1], [0], [0], [0, 0, 1, 0], [], []>} : vector<8x8xbf16>, vector<8x8xbf16>, vector<8x8xf32> -> vector<8x8xf32>
      %cst_18 = arith.constant -1.000000e+30 : f32
      %39 = vector.broadcast %cst_18 : f32 to vector<8x8xf32>
      %40 = arith.select %26, %38, %39 : vector<8x8xi1>, vector<8x8xf32>
      %c0_19 = arith.constant 0 : index
      %c0_20 = arith.constant 0 : index
      %c0_21 = arith.constant 0 : index
      %41 = vector.load %arg15[%c0_19, %c0_20, %c0_21] : memref<4x8x1xf32, #tpu.memory_space<vmem>>, vector<1x8x1xf32>
      %42 = vector.shape_cast %41 : vector<1x8x1xf32> to vector<8x1xf32>
      %cst_22 = arith.constant dense<0xFF800000> : vector<8xf32>
      %43 = vector.multi_reduction <maximumf>, %40, %cst_22 [1] : vector<8x8xf32> to vector<8xf32>
      %44 = vector.shape_cast %43 : vector<8xf32> to vector<8x1xf32>
      %45 = arith.maximumf %42, %44 : vector<8x1xf32>
      %46 = arith.subf %42, %45 : vector<8x1xf32>
      %47 = math.exp %46 : vector<8x1xf32>
      %48 = vector.broadcast %45 : vector<8x1xf32> to vector<8x8xf32>
      %49 = arith.subf %40, %48 : vector<8x8xf32>
      %50 = math.exp %49 : vector<8x8xf32>
      %c0_23 = arith.constant 0 : index
      %c0_24 = arith.constant 0 : index
      %c0_25 = arith.constant 0 : index
      %51 = vector.load %arg16[%c0_23, %c0_24, %c0_25] : memref<4x8x1xf32, #tpu.memory_space<vmem>>, vector<1x8x1xf32>
      %52 = vector.shape_cast %51 : vector<1x8x1xf32> to vector<8x1xf32>
      %53 = arith.mulf %47, %52 : vector<8x1xf32>
      %cst_26 = arith.constant dense<0.000000e+00> : vector<8xf32>
      %54 = vector.multi_reduction <add>, %50, %cst_26 [1] : vector<8x8xf32> to vector<8xf32>
      %55 = vector.shape_cast %54 : vector<8xf32> to vector<8x1xf32>
      %56 = arith.addf %53, %55 : vector<8x1xf32>
      %c0_27 = arith.constant 0 : index
      %c0_28 = arith.constant 0 : index
      %c0_29 = arith.constant 0 : index
      %57 = vector.load %arg16[%c0_27, %c0_28, %c0_29] : memref<4x8x1xf32, #tpu.memory_space<vmem>>, vector<1x8x1xf32>
      %58 = vector.shape_cast %57 : vector<1x8x1xf32> to vector<8x1xf32>
      %59 = vector.shape_cast %56 : vector<8x1xf32> to vector<1x8x1xf32>
      tpu.vector_store %arg16[%c0_27, %c0_28, %c0_29], %59 {strides = array<i32>} : memref<4x8x1xf32, #tpu.memory_space<vmem>>, vector<1x8x1xf32>,
      %c0_30 = arith.constant 0 : index
      %c0_31 = arith.constant 0 : index
      %c0_32 = arith.constant 0 : index
      %60 = vector.load %arg14[%c0_30, %c0_31, %c0_32] : memref<4x8x8xf32, #tpu.memory_space<vmem>>, vector<1x8x8xf32>
      %61 = vector.shape_cast %60 : vector<1x8x8xf32> to vector<8x8xf32>
      %62 = vector.broadcast %47 : vector<8x1xf32> to vector<8x8xf32>
      %63 = arith.mulf %62, %61 : vector<8x8xf32>
      %64 = arith.truncf %50 : vector<8x8xf32> to vector<8x8xbf16>
      %cst_33 = arith.constant dense<0.000000e+00> : vector<8x8xf32>
      %65 = tpu.matmul %64, %36, %cst_33 {dimension_numbers = #tpu.dot_dimension_numbers<[1], [0], [0], [1], [0, 0, 1, 1], [], []>} : vector<8x8xbf16>, vector<8x8xbf16>, vector<8x8xf32> -> vector<8x8xf32>
      %66 = arith.addf %63, %65 : vector<8x8xf32>
      %c0_34 = arith.constant 0 : index
      %c0_35 = arith.constant 0 : index
      %c0_36 = arith.constant 0 : index
      %67 = vector.load %arg14[%c0_34, %c0_35, %c0_36] : memref<4x8x8xf32, #tpu.memory_space<vmem>>, vector<1x8x8xf32>
      %68 = vector.shape_cast %67 : vector<1x8x8xf32> to vector<8x8xf32>
      %69 = vector.shape_cast %66 : vector<8x8xf32> to vector<1x8x8xf32>
      tpu.vector_store %arg14[%c0_34, %c0_35, %c0_36], %69 {strides = array<i32>} : memref<4x8x8xf32, #tpu.memory_space<vmem>>, vector<1x8x8xf32>,
      %c0_37 = arith.constant 0 : index
      %c0_38 = arith.constant 0 : index
      %c0_39 = arith.constant 0 : index
      %70 = vector.load %arg15[%c0_37, %c0_38, %c0_39] : memref<4x8x1xf32, #tpu.memory_space<vmem>>, vector<1x8x1xf32>
      %71 = vector.shape_cast %70 : vector<1x8x1xf32> to vector<8x1xf32>
      %72 = vector.shape_cast %45 : vector<8x1xf32> to vector<1x8x1xf32>
      tpu.vector_store %arg15[%c0_37, %c0_38, %c0_39], %72 {strides = array<i32>} : memref<4x8x1xf32, #tpu.memory_space<vmem>>, vector<1x8x1xf32>,
      %73 = vector.extract_strided_slice %15 {offsets = [0, 8], sizes = [8, 8], strides = [1, 1]} : vector<8x64xf32> to vector<8x8xf32>
      %74 = arith.mulf %73, %16 : vector<8x8xf32>
      %75 = vector.extract_strided_slice %73 {offsets = [0, 4], sizes = [8, 4], strides = [1, 1]} : vector<8x8xf32> to vector<8x4xf32>
      %76 = vector.extract_strided_slice %73 {offsets = [0, 0], sizes = [8, 4], strides = [1, 1]} : vector<8x8xf32> to vector<8x4xf32>
      %77 = tpu.concatenate %75, %76 in 1 : vector<8x4xf32>, vector<8x4xf32> -> vector<8x8xf32>
      %78 = arith.mulf %77, %17 : vector<8x8xf32>
      %79 = arith.addf %74, %78 : vector<8x8xf32>
      %80 = arith.truncf %79 : vector<8x8xf32> to vector<8x8xbf16>
      %81 = vector.extract_strided_slice %15 {offsets = [0, 40], sizes = [8, 8], strides = [1, 1]} : vector<8x64xf32> to vector<8x8xf32>
      %82 = arith.truncf %81 : vector<8x8xf32> to vector<8x8xbf16>
      %c0_40 = arith.constant 0 : index
      %c8 = arith.constant 8 : index
      %83 = vector.load %arg13[%c0_40, %c8] : memref<8x32xbf16, #tpu.memory_space<vmem>>, vector<8x8xbf16>
      %cst_41 = arith.constant dense<0.000000e+00> : vector<8x8xf32>
      %84 = tpu.matmul %83, %80, %cst_41 {dimension_numbers = #tpu.dot_dimension_numbers<[1], [1], [0], [0], [0, 0, 1, 0], [], []>} : vector<8x8xbf16>, vector<8x8xbf16>, vector<8x8xf32> -> vector<8x8xf32>
      %cst_42 = arith.constant -1.000000e+30 : f32
      %85 = vector.broadcast %cst_42 : f32 to vector<8x8xf32>
      %86 = arith.select %26, %84, %85 : vector<8x8xi1>, vector<8x8xf32>
      %c1 = arith.constant 1 : index
      %c0_43 = arith.constant 0 : index
      %c0_44 = arith.constant 0 : index
      %87 = vector.load %arg15[%c1, %c0_43, %c0_44] : memref<4x8x1xf32, #tpu.memory_space<vmem>>, vector<1x8x1xf32>
      %88 = vector.shape_cast %87 : vector<1x8x1xf32> to vector<8x1xf32>
      %cst_45 = arith.constant dense<0xFF800000> : vector<8xf32>
      %89 = vector.multi_reduction <maximumf>, %86, %cst_45 [1] : vector<8x8xf32> to vector<8xf32>
      %90 = vector.shape_cast %89 : vector<8xf32> to vector<8x1xf32>
      %91 = arith.maximumf %88, %90 : vector<8x1xf32>
      %92 = arith.subf %88, %91 : vector<8x1xf32>
      %93 = math.exp %92 : vector<8x1xf32>
      %94 = vector.broadcast %91 : vector<8x1xf32> to vector<8x8xf32>
      %95 = arith.subf %86, %94 : vector<8x8xf32>
      %96 = math.exp %95 : vector<8x8xf32>
      %c1_46 = arith.constant 1 : index
      %c0_47 = arith.constant 0 : index
      %c0_48 = arith.constant 0 : index
      %97 = vector.load %arg16[%c1_46, %c0_47, %c0_48] : memref<4x8x1xf32, #tpu.memory_space<vmem>>, vector<1x8x1xf32>
      %98 = vector.shape_cast %97 : vector<1x8x1xf32> to vector<8x1xf32>
      %99 = arith.mulf %93, %98 : vector<8x1xf32>
      %cst_49 = arith.constant dense<0.000000e+00> : vector<8xf32>
      %100 = vector.multi_reduction <add>, %96, %cst_49 [1] : vector<8x8xf32> to vector<8xf32>
      %101 = vector.shape_cast %100 : vector<8xf32> to vector<8x1xf32>
      %102 = arith.addf %99, %101 : vector<8x1xf32>
      %c1_50 = arith.constant 1 : index
      %c0_51 = arith.constant 0 : index
      %c0_52 = arith.constant 0 : index
      %103 = vector.load %arg16[%c1_50, %c0_51, %c0_52] : memref<4x8x1xf32, #tpu.memory_space<vmem>>, vector<1x8x1xf32>
      %104 = vector.shape_cast %103 : vector<1x8x1xf32> to vector<8x1xf32>
      %105 = vector.shape_cast %102 : vector<8x1xf32> to vector<1x8x1xf32>
      tpu.vector_store %arg16[%c1_50, %c0_51, %c0_52], %105 {strides = array<i32>} : memref<4x8x1xf32, #tpu.memory_space<vmem>>, vector<1x8x1xf32>,
      %c1_53 = arith.constant 1 : index
      %c0_54 = arith.constant 0 : index
      %c0_55 = arith.constant 0 : index
      %106 = vector.load %arg14[%c1_53, %c0_54, %c0_55] : memref<4x8x8xf32, #tpu.memory_space<vmem>>, vector<1x8x8xf32>
      %107 = vector.shape_cast %106 : vector<1x8x8xf32> to vector<8x8xf32>
      %108 = vector.broadcast %93 : vector<8x1xf32> to vector<8x8xf32>
      %109 = arith.mulf %108, %107 : vector<8x8xf32>
      %110 = arith.truncf %96 : vector<8x8xf32> to vector<8x8xbf16>
      %cst_56 = arith.constant dense<0.000000e+00> : vector<8x8xf32>
      %111 = tpu.matmul %110, %82, %cst_56 {dimension_numbers = #tpu.dot_dimension_numbers<[1], [0], [0], [1], [0, 0, 1, 1], [], []>} : vector<8x8xbf16>, vector<8x8xbf16>, vector<8x8xf32> -> vector<8x8xf32>
      %112 = arith.addf %109, %111 : vector<8x8xf32>
      %c1_57 = arith.constant 1 : index
      %c0_58 = arith.constant 0 : index
      %c0_59 = arith.constant 0 : index
      %113 = vector.load %arg14[%c1_57, %c0_58, %c0_59] : memref<4x8x8xf32, #tpu.memory_space<vmem>>, vector<1x8x8xf32>
      %114 = vector.shape_cast %113 : vector<1x8x8xf32> to vector<8x8xf32>
      %115 = vector.shape_cast %112 : vector<8x8xf32> to vector<1x8x8xf32>
      tpu.vector_store %arg14[%c1_57, %c0_58, %c0_59], %115 {strides = array<i32>} : memref<4x8x8xf32, #tpu.memory_space<vmem>>, vector<1x8x8xf32>,
      %c1_60 = arith.constant 1 : index
      %c0_61 = arith.constant 0 : index
      %c0_62 = arith.constant 0 : index
      %116 = vector.load %arg15[%c1_60, %c0_61, %c0_62] : memref<4x8x1xf32, #tpu.memory_space<vmem>>, vector<1x8x1xf32>
      %117 = vector.shape_cast %116 : vector<1x8x1xf32> to vector<8x1xf32>
      %118 = vector.shape_cast %91 : vector<8x1xf32> to vector<1x8x1xf32>
      tpu.vector_store %arg15[%c1_60, %c0_61, %c0_62], %118 {strides = array<i32>} : memref<4x8x1xf32, #tpu.memory_space<vmem>>, vector<1x8x1xf32>,
      %119 = vector.extract_strided_slice %15 {offsets = [0, 16], sizes = [8, 8], strides = [1, 1]} : vector<8x64xf32> to vector<8x8xf32>
      %120 = arith.mulf %119, %16 : vector<8x8xf32>
      %121 = vector.extract_strided_slice %119 {offsets = [0, 4], sizes = [8, 4], strides = [1, 1]} : vector<8x8xf32> to vector<8x4xf32>
      %122 = vector.extract_strided_slice %119 {offsets = [0, 0], sizes = [8, 4], strides = [1, 1]} : vector<8x8xf32> to vector<8x4xf32>
      %123 = tpu.concatenate %121, %122 in 1 : vector<8x4xf32>, vector<8x4xf32> -> vector<8x8xf32>
      %124 = arith.mulf %123, %17 : vector<8x8xf32>
      %125 = arith.addf %120, %124 : vector<8x8xf32>
      %126 = arith.truncf %125 : vector<8x8xf32> to vector<8x8xbf16>
      %127 = vector.extract_strided_slice %15 {offsets = [0, 48], sizes = [8, 8], strides = [1, 1]} : vector<8x64xf32> to vector<8x8xf32>
      %128 = arith.truncf %127 : vector<8x8xf32> to vector<8x8xbf16>
      %c0_63 = arith.constant 0 : index
      %c16 = arith.constant 16 : index
      %129 = vector.load %arg13[%c0_63, %c16] : memref<8x32xbf16, #tpu.memory_space<vmem>>, vector<8x8xbf16>
      %cst_64 = arith.constant dense<0.000000e+00> : vector<8x8xf32>
      %130 = tpu.matmul %129, %126, %cst_64 {dimension_numbers = #tpu.dot_dimension_numbers<[1], [1], [0], [0], [0, 0, 1, 0], [], []>} : vector<8x8xbf16>, vector<8x8xbf16>, vector<8x8xf32> -> vector<8x8xf32>
      %cst_65 = arith.constant -1.000000e+30 : f32
      %131 = vector.broadcast %cst_65 : f32 to vector<8x8xf32>
      %132 = arith.select %26, %130, %131 : vector<8x8xi1>, vector<8x8xf32>
      %c2 = arith.constant 2 : index
      %c0_66 = arith.constant 0 : index
      %c0_67 = arith.constant 0 : index
      %133 = vector.load %arg15[%c2, %c0_66, %c0_67] : memref<4x8x1xf32, #tpu.memory_space<vmem>>, vector<1x8x1xf32>
      %134 = vector.shape_cast %133 : vector<1x8x1xf32> to vector<8x1xf32>
      %cst_68 = arith.constant dense<0xFF800000> : vector<8xf32>
      %135 = vector.multi_reduction <maximumf>, %132, %cst_68 [1] : vector<8x8xf32> to vector<8xf32>
      %136 = vector.shape_cast %135 : vector<8xf32> to vector<8x1xf32>
      %137 = arith.maximumf %134, %136 : vector<8x1xf32>
      %138 = arith.subf %134, %137 : vector<8x1xf32>
      %139 = math.exp %138 : vector<8x1xf32>
      %140 = vector.broadcast %137 : vector<8x1xf32> to vector<8x8xf32>
      %141 = arith.subf %132, %140 : vector<8x8xf32>
      %142 = math.exp %141 : vector<8x8xf32>
      %c2_69 = arith.constant 2 : index
      %c0_70 = arith.constant 0 : index
      %c0_71 = arith.constant 0 : index
      %143 = vector.load %arg16[%c2_69, %c0_70, %c0_71] : memref<4x8x1xf32, #tpu.memory_space<vmem>>, vector<1x8x1xf32>
      %144 = vector.shape_cast %143 : vector<1x8x1xf32> to vector<8x1xf32>
      %145 = arith.mulf %139, %144 : vector<8x1xf32>
      %cst_72 = arith.constant dense<0.000000e+00> : vector<8xf32>
      %146 = vector.multi_reduction <add>, %142, %cst_72 [1] : vector<8x8xf32> to vector<8xf32>
      %147 = vector.shape_cast %146 : vector<8xf32> to vector<8x1xf32>
      %148 = arith.addf %145, %147 : vector<8x1xf32>
      %c2_73 = arith.constant 2 : index
      %c0_74 = arith.constant 0 : index
      %c0_75 = arith.constant 0 : index
      %149 = vector.load %arg16[%c2_73, %c0_74, %c0_75] : memref<4x8x1xf32, #tpu.memory_space<vmem>>, vector<1x8x1xf32>
      %150 = vector.shape_cast %149 : vector<1x8x1xf32> to vector<8x1xf32>
      %151 = vector.shape_cast %148 : vector<8x1xf32> to vector<1x8x1xf32>
      tpu.vector_store %arg16[%c2_73, %c0_74, %c0_75], %151 {strides = array<i32>} : memref<4x8x1xf32, #tpu.memory_space<vmem>>, vector<1x8x1xf32>,
      %c2_76 = arith.constant 2 : index
      %c0_77 = arith.constant 0 : index
      %c0_78 = arith.constant 0 : index
      %152 = vector.load %arg14[%c2_76, %c0_77, %c0_78] : memref<4x8x8xf32, #tpu.memory_space<vmem>>, vector<1x8x8xf32>
      %153 = vector.shape_cast %152 : vector<1x8x8xf32> to vector<8x8xf32>
      %154 = vector.broadcast %139 : vector<8x1xf32> to vector<8x8xf32>
      %155 = arith.mulf %154, %153 : vector<8x8xf32>
      %156 = arith.truncf %142 : vector<8x8xf32> to vector<8x8xbf16>
      %cst_79 = arith.constant dense<0.000000e+00> : vector<8x8xf32>
      %157 = tpu.matmul %156, %128, %cst_79 {dimension_numbers = #tpu.dot_dimension_numbers<[1], [0], [0], [1], [0, 0, 1, 1], [], []>} : vector<8x8xbf16>, vector<8x8xbf16>, vector<8x8xf32> -> vector<8x8xf32>
      %158 = arith.addf %155, %157 : vector<8x8xf32>
      %c2_80 = arith.constant 2 : index
      %c0_81 = arith.constant 0 : index
      %c0_82 = arith.constant 0 : index
      %159 = vector.load %arg14[%c2_80, %c0_81, %c0_82] : memref<4x8x8xf32, #tpu.memory_space<vmem>>, vector<1x8x8xf32>
      %160 = vector.shape_cast %159 : vector<1x8x8xf32> to vector<8x8xf32>
      %161 = vector.shape_cast %158 : vector<8x8xf32> to vector<1x8x8xf32>
      tpu.vector_store %arg14[%c2_80, %c0_81, %c0_82], %161 {strides = array<i32>} : memref<4x8x8xf32, #tpu.memory_space<vmem>>, vector<1x8x8xf32>,
      %c2_83 = arith.constant 2 : index
      %c0_84 = arith.constant 0 : index
      %c0_85 = arith.constant 0 : index
      %162 = vector.load %arg15[%c2_83, %c0_84, %c0_85] : memref<4x8x1xf32, #tpu.memory_space<vmem>>, vector<1x8x1xf32>
      %163 = vector.shape_cast %162 : vector<1x8x1xf32> to vector<8x1xf32>
      %164 = vector.shape_cast %137 : vector<8x1xf32> to vector<1x8x1xf32>
      tpu.vector_store %arg15[%c2_83, %c0_84, %c0_85], %164 {strides = array<i32>} : memref<4x8x1xf32, #tpu.memory_space<vmem>>, vector<1x8x1xf32>,
      %165 = vector.extract_strided_slice %15 {offsets = [0, 24], sizes = [8, 8], strides = [1, 1]} : vector<8x64xf32> to vector<8x8xf32>
      %166 = arith.mulf %165, %16 : vector<8x8xf32>
      %167 = vector.extract_strided_slice %165 {offsets = [0, 4], sizes = [8, 4], strides = [1, 1]} : vector<8x8xf32> to vector<8x4xf32>
      %168 = vector.extract_strided_slice %165 {offsets = [0, 0], sizes = [8, 4], strides = [1, 1]} : vector<8x8xf32> to vector<8x4xf32>
      %169 = tpu.concatenate %167, %168 in 1 : vector<8x4xf32>, vector<8x4xf32> -> vector<8x8xf32>
      %170 = arith.mulf %169, %17 : vector<8x8xf32>
      %171 = arith.addf %166, %170 : vector<8x8xf32>
      %172 = arith.truncf %171 : vector<8x8xf32> to vector<8x8xbf16>
      %173 = vector.extract_strided_slice %15 {offsets = [0, 56], sizes = [8, 8], strides = [1, 1]} : vector<8x64xf32> to vector<8x8xf32>
      %174 = arith.truncf %173 : vector<8x8xf32> to vector<8x8xbf16>
      %c0_86 = arith.constant 0 : index
      %c24 = arith.constant 24 : index
      %175 = vector.load %arg13[%c0_86, %c24] : memref<8x32xbf16, #tpu.memory_space<vmem>>, vector<8x8xbf16>
      %cst_87 = arith.constant dense<0.000000e+00> : vector<8x8xf32>
      %176 = tpu.matmul %175, %172, %cst_87 {dimension_numbers = #tpu.dot_dimension_numbers<[1], [1], [0], [0], [0, 0, 1, 0], [], []>} : vector<8x8xbf16>, vector<8x8xbf16>, vector<8x8xf32> -> vector<8x8xf32>
      %cst_88 = arith.constant -1.000000e+30 : f32
      %177 = vector.broadcast %cst_88 : f32 to vector<8x8xf32>
      %178 = arith.select %26, %176, %177 : vector<8x8xi1>, vector<8x8xf32>
      %c3 = arith.constant 3 : index
      %c0_89 = arith.constant 0 : index
      %c0_90 = arith.constant 0 : index
      %179 = vector.load %arg15[%c3, %c0_89, %c0_90] : memref<4x8x1xf32, #tpu.memory_space<vmem>>, vector<1x8x1xf32>
      %180 = vector.shape_cast %179 : vector<1x8x1xf32> to vector<8x1xf32>
      %cst_91 = arith.constant dense<0xFF800000> : vector<8xf32>
      %181 = vector.multi_reduction <maximumf>, %178, %cst_91 [1] : vector<8x8xf32> to vector<8xf32>
      %182 = vector.shape_cast %181 : vector<8xf32> to vector<8x1xf32>
      %183 = arith.maximumf %180, %182 : vector<8x1xf32>
      %184 = arith.subf %180, %183 : vector<8x1xf32>
      %185 = math.exp %184 : vector<8x1xf32>
      %186 = vector.broadcast %183 : vector<8x1xf32> to vector<8x8xf32>
      %187 = arith.subf %178, %186 : vector<8x8xf32>
      %188 = math.exp %187 : vector<8x8xf32>
      %c3_92 = arith.constant 3 : index
      %c0_93 = arith.constant 0 : index
      %c0_94 = arith.constant 0 : index
      %189 = vector.load %arg16[%c3_92, %c0_93, %c0_94] : memref<4x8x1xf32, #tpu.memory_space<vmem>>, vector<1x8x1xf32>
      %190 = vector.shape_cast %189 : vector<1x8x1xf32> to vector<8x1xf32>
      %191 = arith.mulf %185, %190 : vector<8x1xf32>
      %cst_95 = arith.constant dense<0.000000e+00> : vector<8xf32>
      %192 = vector.multi_reduction <add>, %188, %cst_95 [1] : vector<8x8xf32> to vector<8xf32>
      %193 = vector.shape_cast %192 : vector<8xf32> to vector<8x1xf32>
      %194 = arith.addf %191, %193 : vector<8x1xf32>
      %c3_96 = arith.constant 3 : index
      %c0_97 = arith.constant 0 : index
      %c0_98 = arith.constant 0 : index
      %195 = vector.load %arg16[%c3_96, %c0_97, %c0_98] : memref<4x8x1xf32, #tpu.memory_space<vmem>>, vector<1x8x1xf32>
      %196 = vector.shape_cast %195 : vector<1x8x1xf32> to vector<8x1xf32>
      %197 = vector.shape_cast %194 : vector<8x1xf32> to vector<1x8x1xf32>
      tpu.vector_store %arg16[%c3_96, %c0_97, %c0_98], %197 {strides = array<i32>} : memref<4x8x1xf32, #tpu.memory_space<vmem>>, vector<1x8x1xf32>,
      %c3_99 = arith.constant 3 : index
      %c0_100 = arith.constant 0 : index
      %c0_101 = arith.constant 0 : index
      %198 = vector.load %arg14[%c3_99, %c0_100, %c0_101] : memref<4x8x8xf32, #tpu.memory_space<vmem>>, vector<1x8x8xf32>
      %199 = vector.shape_cast %198 : vector<1x8x8xf32> to vector<8x8xf32>
      %200 = vector.broadcast %185 : vector<8x1xf32> to vector<8x8xf32>
      %201 = arith.mulf %200, %199 : vector<8x8xf32>
      %202 = arith.truncf %188 : vector<8x8xf32> to vector<8x8xbf16>
      %cst_102 = arith.constant dense<0.000000e+00> : vector<8x8xf32>
      %203 = tpu.matmul %202, %174, %cst_102 {dimension_numbers = #tpu.dot_dimension_numbers<[1], [0], [0], [1], [0, 0, 1, 1], [], []>} : vector<8x8xbf16>, vector<8x8xbf16>, vector<8x8xf32> -> vector<8x8xf32>
      %204 = arith.addf %201, %203 : vector<8x8xf32>
      %c3_103 = arith.constant 3 : index
      %c0_104 = arith.constant 0 : index
      %c0_105 = arith.constant 0 : index
      %205 = vector.load %arg14[%c3_103, %c0_104, %c0_105] : memref<4x8x8xf32, #tpu.memory_space<vmem>>, vector<1x8x8xf32>
      %206 = vector.shape_cast %205 : vector<1x8x8xf32> to vector<8x8xf32>
      %207 = vector.shape_cast %204 : vector<8x8xf32> to vector<1x8x8xf32>
      tpu.vector_store %arg14[%c3_103, %c0_104, %c0_105], %207 {strides = array<i32>} : memref<4x8x8xf32, #tpu.memory_space<vmem>>, vector<1x8x8xf32>,
      %c3_106 = arith.constant 3 : index
      %c0_107 = arith.constant 0 : index
      %c0_108 = arith.constant 0 : index
      %208 = vector.load %arg15[%c3_106, %c0_107, %c0_108] : memref<4x8x1xf32, #tpu.memory_space<vmem>>, vector<1x8x1xf32>
      %209 = vector.shape_cast %208 : vector<1x8x1xf32> to vector<8x1xf32>
      %210 = vector.shape_cast %183 : vector<8x1xf32> to vector<1x8x1xf32>
      tpu.vector_store %arg15[%c3_106, %c0_107, %c0_108], %210 {strides = array<i32>} : memref<4x8x1xf32, #tpu.memory_space<vmem>>, vector<1x8x1xf32>,
    } else {
    }
    %c0_i32_3 = arith.constant 0 : i32
    %9 = arith.cmpi eq, %arg2, %c0_i32_3 : i32
    %10 = arith.extui %9 : i1 to i32
    %c0_i32_4 = arith.constant 0 : i32
    %11 = arith.cmpi ne, %10, %c0_i32_4 : i32
    scf.if %11 {
      %c0 = arith.constant 0 : index
      %c0_5 = arith.constant 0 : index
      %c0_6 = arith.constant 0 : index
      %12 = vector.load %arg14[%c0, %c0_5, %c0_6] : memref<4x8x8xf32, #tpu.memory_space<vmem>>, vector<1x8x8xf32>
      %13 = vector.shape_cast %12 : vector<1x8x8xf32> to vector<8x8xf32>
      %c0_7 = arith.constant 0 : index
      %c0_8 = arith.constant 0 : index
      %c0_9 = arith.constant 0 : index
      %14 = vector.load %arg16[%c0_7, %c0_8, %c0_9] : memref<4x8x1xf32, #tpu.memory_space<vmem>>, vector<1x8x1xf32>
      %15 = vector.shape_cast %14 : vector<1x8x1xf32> to vector<8x1xf32>
      %16 = tpu.reciprocal %15 {approx = true} : vector<8x1xf32> -> vector<8x1xf32>
      %17 = vector.broadcast %16 : vector<8x1xf32> to vector<8x8xf32>
      %18 = arith.mulf %13, %17 : vector<8x8xf32>
      %c1 = arith.constant 1 : index
      %c0_10 = arith.constant 0 : index
      %c0_11 = arith.constant 0 : index
      %19 = vector.load %arg14[%c1, %c0_10, %c0_11] : memref<4x8x8xf32, #tpu.memory_space<vmem>>, vector<1x8x8xf32>
      %20 = vector.shape_cast %19 : vector<1x8x8xf32> to vector<8x8xf32>
      %c1_12 = arith.constant 1 : index
      %c0_13 = arith.constant 0 : index
      %c0_14 = arith.constant 0 : index
      %21 = vector.load %arg16[%c1_12, %c0_13, %c0_14] : memref<4x8x1xf32, #tpu.memory_space<vmem>>, vector<1x8x1xf32>
      %22 = vector.shape_cast %21 : vector<1x8x1xf32> to vector<8x1xf32>
      %23 = tpu.reciprocal %22 {approx = true} : vector<8x1xf32> -> vector<8x1xf32>
      %24 = vector.broadcast %23 : vector<8x1xf32> to vector<8x8xf32>
      %25 = arith.mulf %20, %24 : vector<8x8xf32>
      %c2 = arith.constant 2 : index
      %c0_15 = arith.constant 0 : index
      %c0_16 = arith.constant 0 : index
      %26 = vector.load %arg14[%c2, %c0_15, %c0_16] : memref<4x8x8xf32, #tpu.memory_space<vmem>>, vector<1x8x8xf32>
      %27 = vector.shape_cast %26 : vector<1x8x8xf32> to vector<8x8xf32>
      %c2_17 = arith.constant 2 : index
      %c0_18 = arith.constant 0 : index
      %c0_19 = arith.constant 0 : index
      %28 = vector.load %arg16[%c2_17, %c0_18, %c0_19] : memref<4x8x1xf32, #tpu.memory_space<vmem>>, vector<1x8x1xf32>
      %29 = vector.shape_cast %28 : vector<1x8x1xf32> to vector<8x1xf32>
      %30 = tpu.reciprocal %29 {approx = true} : vector<8x1xf32> -> vector<8x1xf32>
      %31 = vector.broadcast %30 : vector<8x1xf32> to vector<8x8xf32>
      %32 = arith.mulf %27, %31 : vector<8x8xf32>
      %c3 = arith.constant 3 : index
      %c0_20 = arith.constant 0 : index
      %c0_21 = arith.constant 0 : index
      %33 = vector.load %arg14[%c3, %c0_20, %c0_21] : memref<4x8x8xf32, #tpu.memory_space<vmem>>, vector<1x8x8xf32>
      %34 = vector.shape_cast %33 : vector<1x8x8xf32> to vector<8x8xf32>
      %c3_22 = arith.constant 3 : index
      %c0_23 = arith.constant 0 : index
      %c0_24 = arith.constant 0 : index
      %35 = vector.load %arg16[%c3_22, %c0_23, %c0_24] : memref<4x8x1xf32, #tpu.memory_space<vmem>>, vector<1x8x1xf32>
      %36 = vector.shape_cast %35 : vector<1x8x1xf32> to vector<8x1xf32>
      %37 = tpu.reciprocal %36 {approx = true} : vector<8x1xf32> -> vector<8x1xf32>
      %38 = vector.broadcast %37 : vector<8x1xf32> to vector<8x8xf32>
      %39 = arith.mulf %34, %38 : vector<8x8xf32>
      %40 = tpu.concatenate %18, %25, %32, %39 in 1 : vector<8x8xf32>, vector<8x8xf32>, vector<8x8xf32>, vector<8x8xf32> -> vector<8x32xf32>
      %41 = arith.truncf %40 : vector<8x32xf32> to vector<8x32xbf16>
      %c0_25 = arith.constant 0 : index
      %c0_26 = arith.constant 0 : index
      %42 = vector.load %arg7[%c0_25, %c0_26] : memref<32x32xbf16, #tpu.memory_space<vmem>>, vector<32x32xbf16>
      %cst = arith.constant dense<0.000000e+00> : vector<8x32xf32>
      %43 = tpu.matmul %41, %42, %cst {dimension_numbers = #tpu.dot_dimension_numbers<[1], [0], [0], [1], [0, 0, 1, 1], [], []>} : vector<8x32xbf16>, vector<32x32xbf16>, vector<8x32xf32> -> vector<8x32xf32>
      %c0_27 = arith.constant 0 : index
      %c0_28 = arith.constant 0 : index
      %c0_29 = arith.constant 0 : index
      %44 = vector.load %arg12[%c0_27, %c0_28, %c0_29] : memref<1x8x32xf32, #tpu.memory_space<vmem>>, vector<1x8x32xf32>
      %45 = vector.shape_cast %44 : vector<1x8x32xf32> to vector<8x32xf32>
      %46 = vector.shape_cast %43 : vector<8x32xf32> to vector<1x8x32xf32>
      tpu.vector_store %arg12[%c0_27, %c0_28, %c0_29], %46 {strides = array<i32>} : memref<1x8x32xf32, #tpu.memory_space<vmem>>, vector<1x8x32xf32>,
    } else {
    }
    return
  }
  func.func @transform_0(%arg0: i32, %arg1: i32, %arg2: i32) -> (i32, i32, i32) {
    %c0_i32 = arith.constant 0 : i32
    %c0_i32_0 = arith.constant 0 : i32
    return %arg0, %arg1, %c0_i32 : i32, i32, i32
  }
  func.func @transform_1(%arg0: i32, %arg1: i32, %arg2: i32) -> (i32, i32, i32) {
    %c0_i32 = arith.constant 0 : i32
    %c0_i32_0 = arith.constant 0 : i32
    return %arg0, %arg2, %c0_i32 : i32, i32, i32
  }
  func.func @transform_2(%arg0: i32, %arg1: i32, %arg2: i32) -> (i32, i32) {
    %c0_i32 = arith.constant 0 : i32
    %c0_i32_0 = arith.constant 0 : i32
    %c0_i32_1 = arith.constant 0 : i32
    return %c0_i32, %c0_i32_0 : i32, i32
  }
  func.func @transform_3(%arg0: i32, %arg1: i32, %arg2: i32) -> (i32, i32) {
    %c0_i32 = arith.constant 0 : i32
    %c0_i32_0 = arith.constant 0 : i32
    %c0_i32_1 = arith.constant 0 : i32
    return %c0_i32, %c0_i32_0 : i32, i32
  }
  func.func @transform_4(%arg0: i32, %arg1: i32, %arg2: i32) -> (i32, i32) {
    %c0_i32 = arith.constant 0 : i32
    %c0_i32_0 = arith.constant 0 : i32
    %c0_i32_1 = arith.constant 0 : i32
    return %c0_i32, %c0_i32_0 : i32, i32
  }
  func.func @transform_5(%arg0: i32, %arg1: i32, %arg2: i32) -> (i32, i32) {
    %c0_i32 = arith.constant 0 : i32
    %c0_i32_0 = arith.constant 0 : i32
    return %arg1, %c0_i32 : i32, i32
  }
  func.func @transform_6(%arg0: i32, %arg1: i32, %arg2: i32) -> (i32, i32) {
    %c0_i32 = arith.constant 0 : i32
    %c0_i32_0 = arith.constant 0 : i32
    return %arg1, %c0_i32 : i32, i32
  }
  func.func @transform_7(%arg0: i32, %arg1: i32, %arg2: i32) -> (i32, i32) {
    %c0_i32 = arith.constant 0 : i32
    %c0_i32_0 = arith.constant 0 : i32
    return %arg2, %c0_i32 : i32, i32
  }
  func.func @transform_8(%arg0: i32, %arg1: i32, %arg2: i32) -> (i32, i32) {
    %c0_i32 = arith.constant 0 : i32
    %c0_i32_0 = arith.constant 0 : i32
    return %arg2, %c0_i32 : i32, i32
  }
  func.func @transform_9(%arg0: i32, %arg1: i32, %arg2: i32) -> (i32, i32, i32) {
    %c0_i32 = arith.constant 0 : i32
    %c0_i32_0 = arith.constant 0 : i32
    return %arg0, %arg1, %c0_i32 : i32, i32, i32
  }
}

</mosaic_0001>

<llo_original>
// kernel: tpu_custom_call.1
$region0: #{tpu_custom_call.1}
  #allocation0 [shape = 'u32[]', space=smem, size = 0x4, offset = 0x4, fixed_abs, tag = 'smem constant byte address 0x4 - core index']
  #allocation1 [shape = 'u32[72,128]{1,0:T(1,128)}', space=vmem, size = 0x9000, scoped, tag = 'internal scratch']
  #allocation2 [shape = 'bf16[8,32]{1,0:T(8,128)(2,1)}', space=vmem, size = 0x800, scoped, tag = 'scratch operand']
  #allocation3 [shape = 'f32[4,8,8]{2,1,0:T(8,128)}', space=vmem, size = 0x4000, scoped, tag = 'scratch operand']
  #allocation4 [shape = 'f32[4,8,1]{2,1,0:T(8,128)}', space=vmem, size = 0x4000, scoped, tag = 'scratch operand']
  #allocation5 [shape = 'f32[4,8,1]{2,1,0:T(8,128)}', space=vmem, size = 0x4000, scoped, tag = 'scratch operand']
  %s0 = inlined_call_operand.hbm [shape: bf16[2,8,32], index: 0, kind: input, shape index: {}]
  %s1 = inlined_call_operand.hbm [shape: bf16[2,8,32], index: 1, kind: input, shape index: {}]
  %s2 = inlined_call_operand.hbm [shape: bf16[32,32], index: 2, kind: input, shape index: {}]
  %s3 = inlined_call_operand.hbm [shape: bf16[32,64], index: 3, kind: input, shape index: {}]
  %s4 = inlined_call_operand.hbm [shape: bf16[32,32], index: 4, kind: input, shape index: {}]
  %s5 = inlined_call_operand.hbm [shape: f32[8,8], index: 5, kind: input, shape index: {}]
  %s6 = inlined_call_operand.hbm [shape: f32[8,8], index: 6, kind: input, shape index: {}]
  %s7 = inlined_call_operand.hbm [shape: f32[8,8], index: 7, kind: input, shape index: {}]
  %s8 = inlined_call_operand.hbm [shape: f32[8,8], index: 8, kind: input, shape index: {}]
  %s9 = inlined_call_operand.hbm [shape: f32[2,8,32], index: 9, kind: output, shape index: {}]
  %s10 = sld [smem:[#allocation0]]
  $region117: #{tpu_custom_call.1} parent=0
    _
  %s12 = ssub.s32 1, %s10
  %s13 = scalar_select 0, %s12, %s10
  $region1: #{tpu_custom_call.1} parent=0
    #allocation6 [shape = 'u8[4096]{0}', space=vmem, size = 0x1000, scoped, tag = 'input window, operand 0']
    #allocation7 [shape = 's32[2]{0}', space=sflag, size = 0x8, scoped, tag = 'scoped memory for tpu_custom_call.1']
    #allocation8 [shape = 's32[2]{0}', space=sflag, size = 0x8, scoped, tag = 'scoped memory for tpu_custom_call.1']
    #allocation9 [shape = 'u8[4096]{0}', space=vmem, size = 0x1000, scoped, tag = 'input window, operand 1']
    #allocation10 [shape = 's32[2]{0}', space=sflag, size = 0x8, scoped, tag = 'scoped memory for tpu_custom_call.1']
    #allocation11 [shape = 'u8[8192]{0}', space=vmem, size = 0x2000, scoped, tag = 'input window, operand 2, single buffered']
    #allocation12 [shape = 'u8[8192]{0}', space=vmem, size = 0x2000, scoped, tag = 'input window, operand 3, single buffered']
    #allocation13 [shape = 's32[1]{0}', space=sflag, size = 0x4, scoped, tag = 'scoped memory for tpu_custom_call.1']
    #allocation14 [shape = 'u8[8192]{0}', space=vmem, size = 0x2000, scoped, tag = 'input window, operand 4, single buffered']
    #allocation15 [shape = 'u8[4096]{0}', space=vmem, size = 0x1000, scoped, tag = 'input window, operand 5, single buffered']
    #allocation16 [shape = 's32[1]{0}', space=sflag, size = 0x4, scoped, tag = 'scoped memory for tpu_custom_call.1']
    #allocation17 [shape = 'u8[4096]{0}', space=vmem, size = 0x1000, scoped, tag = 'input window, operand 6, single buffered']
    #allocation18 [shape = 'u8[4096]{0}', space=vmem, size = 0x1000, scoped, tag = 'input window, operand 7, single buffered']
    #allocation19 [shape = 's32[1]{0}', space=sflag, size = 0x4, scoped, tag = 'scoped memory for tpu_custom_call.1']
    #allocation20 [shape = 'u8[4096]{0}', space=vmem, size = 0x1000, scoped, tag = 'input window, operand 8, single buffered']
    #allocation21 [shape = 'u8[8192]{0}', space=vmem, size = 0x2000, scoped, tag = 'output window, operand 0']
    %14 = vsyncpa [#allocation7], 0
    %s15 = scalar_lea.sflag [#allocation7], 1
    %16 = vsyncpa %s15, 0
    %17 = vsyncpa [#allocation10], 0
    %s18 = scalar_lea.sflag [#allocation10], 1
    %19 = vsyncpa %s18, 0
    %20 = vsyncpa [#allocation13], 0
    %21 = vsyncpa [#allocation16], 0
    %22 = vsyncpa [#allocation19], 0
    %23 = vsyncpa [#allocation8], 0
    %s24 = scalar_lea.sflag [#allocation8], 1
    %25 = vsyncpa %s24, 0
    loop: start=0, step=1, limit=4
    $region2: #{tpu_custom_call.1} parent=1 // loop_pre_header
      _
    $region3: #{tpu_custom_call.1} parent=1 // loop_header
      %s27 = sphi 0, %s31
      %p28 = scmp.ge.s32.totalorder %s27, 4
      %s34 = sphi 0, %s53
      %s35 = sphi 0, %s49
      %s36 = sphi 0, %s45
      %s37 = sphi 0, %s34
      %s38 = sphi 0, %s35
      %s39 = sphi 0, %s36
      %s40 = sphi 0, %s37
      %s41 = sphi 0, %s38
      %s42 = sphi 0, %s39
      %s58 = sphi 0, %s60
      %s61 = sphi 0, %s58
      %s62 = sphi 0, %s61
      %s78 = sphi 0, %s62
      %s86 = sphi 0, %s88
      %s89 = sphi 0, %s86
      %s90 = sphi 0, %s89
      %s106 = sphi 0, %s90
      %s110 = sphi 0, %s110
      %s112 = sphi 0, %s110
      %s113 = sphi 0, %s112
      %s127 = sphi 0, %s113
      %s131 = sphi 0, %s131
      %s133 = sphi 0, %s131
      %s134 = sphi 0, %s133
      %s148 = sphi 0, %s134
      %s152 = sphi 0, %s152
      %s154 = sphi 0, %s152
      %s155 = sphi 0, %s154
      %s169 = sphi 0, %s155
      %s175 = sphi 0, %s177
      %s178 = sphi 0, %s175
      %s179 = sphi 0, %s178
      %s195 = sphi 0, %s179
      %s201 = sphi 0, %s203
      %s204 = sphi 0, %s201
      %s205 = sphi 0, %s204
      %s221 = sphi 0, %s205
      %s227 = sphi 0, %s229
      %s230 = sphi 0, %s227
      %s231 = sphi 0, %s230
      %s247 = sphi 0, %s231
      %s253 = sphi 0, %s255
      %s256 = sphi 0, %s253
      %s257 = sphi 0, %s256
      %s273 = sphi 0, %s257
      %s281 = sphi 0, %s283
      %s284 = sphi 0, %s281
      %s285 = sphi 0, %s284
      %s301 = sphi 0, %s285
    $region4: #{tpu_custom_call.1} parent=1 // loop_header_branch
      %30 = sbr.rel (%p28) target = $region8
    $region5: #{tpu_custom_call.1} parent=1 // loop_body
      %s32 = ssub.s32 %s27, 1
      %s33 = ssub.s32 %s27, 2
      %s43 = sadd.s32 1, %s36
      %p44 = scmp.ge.s32.totalorder %s43, 1
      %s45 = scalar_select %p44, 0, %s43
      %s46 = sadd.s32 1, %s35
      %s47 = scalar_select %p44, %s46, %s35
      %p48 = scmp.ge.s32.totalorder %s47, 1
      %s49 = scalar_select %p48, 0, %s47
      %s50 = sadd.s32 1, %s34
      %s51 = scalar_select %p48, %s50, %s34
      %p52 = scmp.ge.s32.totalorder %s51, 2
      %s53 = scalar_select %p52, 0, %s51
      %s54 = ssub.s32 %s34, %s53
      %s55 = ssub.s32 %s35, %s49
      %s56 = sor.u32 %s54, %s55
      %p57 = scmp.eq.s32.totalorder %s56, 0
      %s59 = sadd.s32 %s58, 1
      %s60 = scalar_select %p57, %s58, %s59
      %p63 = pneg %p57
      %p64 = scmp.eq.s32.totalorder %s27, 1
      %p65 = por %p63, %p64
      %p66 = scmp.ne.s32.totalorder %s58, %s61
      %p67 = scmp.eq.s32.totalorder %s27, 0
      %p68 = por %p66, %p67
      %p69 = scmp.ne.s32.totalorder %s58, %s61
      %p70 = scmp.eq.s32.totalorder %s32, 1
      %p71 = por %p69, %p70
      %p72 = scmp.ne.s32.totalorder %s61, %s62
      %p73 = scmp.eq.s32.totalorder %s32, 0
      %p74 = por %p72, %p73
      %p75 = scmp.ne.s32.totalorder %s61, %s62
      %p76 = scmp.eq.s32.totalorder %s33, 1
      %p77 = por %p75, %p76
      %p79 = scmp.ne.s32.totalorder %s62, %s78
      %p80 = scmp.eq.s32.totalorder %s33, 0
      %p81 = por %p79, %p80
      %s82 = ssub.s32 %s34, %s53
      %s83 = ssub.s32 %s36, %s45
      %s84 = sor.u32 %s82, %s83
      %p85 = scmp.eq.s32.totalorder %s84, 0
      %s87 = sadd.s32 %s86, 1
      %s88 = scalar_select %p85, %s86, %s87
      %p91 = pneg %p85
      %p92 = scmp.eq.s32.totalorder %s27, 1
      %p93 = por %p91, %p92
      %p94 = scmp.ne.s32.totalorder %s86, %s89
      %p95 = scmp.eq.s32.totalorder %s27, 0
      %p96 = por %p94, %p95
      %p97 = scmp.ne.s32.totalorder %s86, %s89
      %p98 = scmp.eq.s32.totalorder %s32, 1
      %p99 = por %p97, %p98
      %p100 = scmp.ne.s32.totalorder %s89, %s90
      %p101 = scmp.eq.s32.totalorder %s32, 0
      %p102 = por %p100, %p101
      %p103 = scmp.ne.s32.totalorder %s89, %s90
      %p104 = scmp.eq.s32.totalorder %s33, 1
      %p105 = por %p103, %p104
      %p107 = scmp.ne.s32.totalorder %s90, %s106
      %p108 = scmp.eq.s32.totalorder %s33, 0
      %p109 = por %p107, %p108
      %s111 = sadd.s32 %s110, 1
      %p114 = scmp.eq.s32.totalorder %s27, 1
      %p115 = scmp.ne.s32.totalorder %s110, %s112
      %p116 = scmp.eq.s32.totalorder %s27, 0
      %p117 = por %p115, %p116
      %p118 = scmp.ne.s32.totalorder %s110, %s112
      %p119 = scmp.eq.s32.totalorder %s32, 1
      %p120 = por %p118, %p119
      %p121 = scmp.ne.s32.totalorder %s112, %s113
      %p122 = scmp.eq.s32.totalorder %s32, 0
      %p123 = por %p121, %p122
      %p124 = scmp.ne.s32.totalorder %s112, %s113
      %p125 = scmp.eq.s32.totalorder %s33, 1
      %p126 = por %p124, %p125
      %p128 = scmp.ne.s32.totalorder %s113, %s127
      %p129 = scmp.eq.s32.totalorder %s33, 0
      %p130 = por %p128, %p129
      %s132 = sadd.s32 %s131, 1
      %p135 = scmp.eq.s32.totalorder %s27, 1
      %p136 = scmp.ne.s32.totalorder %s131, %s133
      %p137 = scmp.eq.s32.totalorder %s27, 0
      %p138 = por %p136, %p137
      %p139 = scmp.ne.s32.totalorder %s131, %s133
      %p140 = scmp.eq.s32.totalorder %s32, 1
      %p141 = por %p139, %p140
      %p142 = scmp.ne.s32.totalorder %s133, %s134
      %p143 = scmp.eq.s32.totalorder %s32, 0
      %p144 = por %p142, %p143
      %p145 = scmp.ne.s32.totalorder %s133, %s134
      %p146 = scmp.eq.s32.totalorder %s33, 1
      %p147 = por %p145, %p146
      %p149 = scmp.ne.s32.totalorder %s134, %s148
      %p150 = scmp.eq.s32.totalorder %s33, 0
      %p151 = por %p149, %p150
      %s153 = sadd.s32 %s152, 1
      %p156 = scmp.eq.s32.totalorder %s27, 1
      %p157 = scmp.ne.s32.totalorder %s152, %s154
      %p158 = scmp.eq.s32.totalorder %s27, 0
      %p159 = por %p157, %p158
      %p160 = scmp.ne.s32.totalorder %s152, %s154
      %p161 = scmp.eq.s32.totalorder %s32, 1
      %p162 = por %p160, %p161
      %p163 = scmp.ne.s32.totalorder %s154, %s155
      %p164 = scmp.eq.s32.totalorder %s32, 0
      %p165 = por %p163, %p164
      %p166 = scmp.ne.s32.totalorder %s154, %s155
      %p167 = scmp.eq.s32.totalorder %s33, 1
      %p168 = por %p166, %p167
      %p170 = scmp.ne.s32.totalorder %s155, %s169
      %p171 = scmp.eq.s32.totalorder %s33, 0
      %p172 = por %p170, %p171
      %s173 = ssub.s32 %s35, %s49
      %p174 = scmp.eq.s32.totalorder %s173, 0
      %s176 = sadd.s32 %s175, 1
      %s177 = scalar_select %p174, %s175, %s176
      %p180 = pneg %p174
      %p181 = scmp.eq.s32.totalorder %s27, 1
      %p182 = por %p180, %p181
      %p183 = scmp.ne.s32.totalorder %s175, %s178
      %p184 = scmp.eq.s32.totalorder %s27, 0
      %p185 = por %p183, %p184
      %p186 = scmp.ne.s32.totalorder %s175, %s178
      %p187 = scmp.eq.s32.totalorder %s32, 1
      %p188 = por %p186, %p187
      %p189 = scmp.ne.s32.totalorder %s178, %s179
      %p190 = scmp.eq.s32.totalorder %s32, 0
      %p191 = por %p189, %p190
      %p192 = scmp.ne.s32.totalorder %s178, %s179
      %p193 = scmp.eq.s32.totalorder %s33, 1
      %p194 = por %p192, %p193
      %p196 = scmp.ne.s32.totalorder %s179, %s195
      %p197 = scmp.eq.s32.totalorder %s33, 0
      %p198 = por %p196, %p197
      %s199 = ssub.s32 %s35, %s49
      %p200 = scmp.eq.s32.totalorder %s199, 0
      %s202 = sadd.s32 %s201, 1
      %s203 = scalar_select %p200, %s201, %s202
      %p206 = pneg %p200
      %p207 = scmp.eq.s32.totalorder %s27, 1
      %p208 = por %p206, %p207
      %p209 = scmp.ne.s32.totalorder %s201, %s204
      %p210 = scmp.eq.s32.totalorder %s27, 0
      %p211 = por %p209, %p210
      %p212 = scmp.ne.s32.totalorder %s201, %s204
      %p213 = scmp.eq.s32.totalorder %s32, 1
      %p214 = por %p212, %p213
      %p215 = scmp.ne.s32.totalorder %s204, %s205
      %p216 = scmp.eq.s32.totalorder %s32, 0
      %p217 = por %p215, %p216
      %p218 = scmp.ne.s32.totalorder %s204, %s205
      %p219 = scmp.eq.s32.totalorder %s33, 1
      %p220 = por %p218, %p219
      %p222 = scmp.ne.s32.totalorder %s205, %s221
      %p223 = scmp.eq.s32.totalorder %s33, 0
      %p224 = por %p222, %p223
      %s225 = ssub.s32 %s36, %s45
      %p226 = scmp.eq.s32.totalorder %s225, 0
      %s228 = sadd.s32 %s227, 1
      %s229 = scalar_select %p226, %s227, %s228
      %p232 = pneg %p226
      %p233 = scmp.eq.s32.totalorder %s27, 1
      %p234 = por %p232, %p233
      %p235 = scmp.ne.s32.totalorder %s227, %s230
      %p236 = scmp.eq.s32.totalorder %s27, 0
      %p237 = por %p235, %p236
      %p238 = scmp.ne.s32.totalorder %s227, %s230
      %p239 = scmp.eq.s32.totalorder %s32, 1
      %p240 = por %p238, %p239
      %p241 = scmp.ne.s32.totalorder %s230, %s231
      %p242 = scmp.eq.s32.totalorder %s32, 0
      %p243 = por %p241, %p242
      %p244 = scmp.ne.s32.totalorder %s230, %s231
      %p245 = scmp.eq.s32.totalorder %s33, 1
      %p246 = por %p244, %p245
      %p248 = scmp.ne.s32.totalorder %s231, %s247
      %p249 = scmp.eq.s32.totalorder %s33, 0
      %p250 = por %p248, %p249
      %s251 = ssub.s32 %s36, %s45
      %p252 = scmp.eq.s32.totalorder %s251, 0
      %s254 = sadd.s32 %s253, 1
      %s255 = scalar_select %p252, %s253, %s254
      %p258 = pneg %p252
      %p259 = scmp.eq.s32.totalorder %s27, 1
      %p260 = por %p258, %p259
      %p261 = scmp.ne.s32.totalorder %s253, %s256
      %p262 = scmp.eq.s32.totalorder %s27, 0
      %p263 = por %p261, %p262
      %p264 = scmp.ne.s32.totalorder %s253, %s256
      %p265 = scmp.eq.s32.totalorder %s32, 1
      %p266 = por %p264, %p265
      %p267 = scmp.ne.s32.totalorder %s256, %s257
      %p268 = scmp.eq.s32.totalorder %s32, 0
      %p269 = por %p267, %p268
      %p270 = scmp.ne.s32.totalorder %s256, %s257
      %p271 = scmp.eq.s32.totalorder %s33, 1
      %p272 = por %p270, %p271
      %p274 = scmp.ne.s32.totalorder %s257, %s273
      %p275 = scmp.eq.s32.totalorder %s33, 0
      %p276 = por %p274, %p275
      %s277 = ssub.s32 %s34, %s53
      %s278 = ssub.s32 %s35, %s49
      %s279 = sor.u32 %s277, %s278
      %p280 = scmp.eq.s32.totalorder %s279, 0
      %s282 = sadd.s32 %s281, 1
      %s283 = scalar_select %p280, %s281, %s282
      %p286 = pneg %p280
      %p287 = scmp.eq.s32.totalorder %s27, 1
      %p288 = por %p286, %p287
      %p289 = scmp.ne.s32.totalorder %s281, %s284
      %p290 = scmp.eq.s32.totalorder %s27, 0
      %p291 = por %p289, %p290
      %p292 = scmp.ne.s32.totalorder %s281, %s284
      %p293 = scmp.eq.s32.totalorder %s32, 1
      %p294 = por %p292, %p293
      %p295 = scmp.ne.s32.totalorder %s284, %s285
      %p296 = scmp.eq.s32.totalorder %s32, 0
      %p297 = por %p295, %p296
      %p298 = scmp.ne.s32.totalorder %s284, %s285
      %p299 = scmp.eq.s32.totalorder %s33, 1
      %p300 = por %p298, %p299
      %p302 = scmp.ne.s32.totalorder %s285, %s301
      %p303 = scmp.eq.s32.totalorder %s33, 0
      %p304 = por %p302, %p303
      %p305 = scmp.le.s32.totalorder 1, %s27
      %p306 = scmp.lt.s32.totalorder %s27, 3
      %p307 = pnand %p305, %p306
      %p308 = pneg %p307
      // Predicated region
      $region9: #{tpu_custom_call.1} parent=5 // pred_check
        _
      $region10: #{tpu_custom_call.1} parent=5 // pred_check_branch
        %310 = sbr.rel (%p307) target = $region12
      $region11: #{tpu_custom_call.1} parent=5 // pred_region
        %s311 = ssub.s32 %s27, 1
        // Predicated region
        $region13: #{tpu_custom_call.1} parent=11 // pred_check
          %p312 = pneg %p123
        $region14: #{tpu_custom_call.1} parent=11 // pred_check_branch
          %314 = sbr.rel (%p312) target = $region16
        $region15: #{tpu_custom_call.1} parent=11 // pred_region
          %316 = vsyncadd [#allocation10], 0
          %s317 = sshll.u32 %s2, 4
          %s318 = int_to_ptr.hbm [resolvable:$true] %s317
          %s319 = sshll.u32 [#allocation11], 4
          %s320 = int_to_ptr.vmem [resolvable:$true] %s319
          %325 = dma.hbm_to_vmem [thread:$0]  %s318, 256, %s320, [#allocation10], 64, 64, 4
        $region16: #{tpu_custom_call.1} parent=11 // pred_fallthru
          _
        // Predicated region
        $region17: #{tpu_custom_call.1} parent=11 // pred_check
          %p326 = pneg %p144
        $region18: #{tpu_custom_call.1} parent=11 // pred_check_branch
          %328 = sbr.rel (%p326) target = $region20
        $region19: #{tpu_custom_call.1} parent=11 // pred_region
          %330 = vsyncadd [#allocation13], 0
          %s331 = sshll.u32 %s3, 4
          %s332 = int_to_ptr.hbm [resolvable:$true] %s331
          %s333 = sshll.u32 [#allocation12], 4
          %s334 = int_to_ptr.vmem [resolvable:$true] %s333
          %339 = dma.hbm_to_vmem [thread:$0]  %s332, 256, %s334, [#allocation13], 64, 64, 4
        $region20: #{tpu_custom_call.1} parent=11 // pred_fallthru
          _
        // Predicated region
        $region21: #{tpu_custom_call.1} parent=11 // pred_check
          %p340 = pneg %p165
        $region22: #{tpu_custom_call.1} parent=11 // pred_check_branch
          %342 = sbr.rel (%p340) target = $region24
        $region23: #{tpu_custom_call.1} parent=11 // pred_region
          %344 = vsyncadd [#allocation13], 0
          %s345 = sshll.u32 %s4, 4
          %s346 = int_to_ptr.hbm [resolvable:$true] %s345
          %s347 = sshll.u32 [#allocation14], 4
          %s348 = int_to_ptr.vmem [resolvable:$true] %s347
          %353 = dma.hbm_to_vmem [thread:$0]  %s346, 256, %s348, [#allocation13], 64, 64, 4
        $region24: #{tpu_custom_call.1} parent=11 // pred_fallthru
          _
        // Predicated region
        $region25: #{tpu_custom_call.1} parent=11 // pred_check
          %p354 = pneg %p191
        $region26: #{tpu_custom_call.1} parent=11 // pred_check_branch
          %356 = sbr.rel (%p354) target = $region28
        $region27: #{tpu_custom_call.1} parent=11 // pred_region
          %358 = vsyncadd [#allocation16], 0
          %s359 = smul.addr %s38, 8
          %s360 = scalar_lea.hbm %s5, %s359
          %s362 = sshll.u32 %s360, 4
          %s363 = int_to_ptr.hbm [resolvable:$true] %s362
          %s364 = sshll.u32 [#allocation15], 4
          %s365 = int_to_ptr.vmem [resolvable:$true] %s364
          %367 = dma.hbm_to_vmem [thread:$0]  %s363, 128, %s365, [#allocation16]
        $region28: #{tpu_custom_call.1} parent=11 // pred_fallthru
          _
        // Predicated region
        $region29: #{tpu_custom_call.1} parent=11 // pred_check
          %p368 = pneg %p217
        $region30: #{tpu_custom_call.1} parent=11 // pred_check_branch
          %370 = sbr.rel (%p368) target = $region32
        $region31: #{tpu_custom_call.1} parent=11 // pred_region
          %372 = vsyncadd [#allocation16], 0
          %s373 = smul.addr %s38, 8
          %s374 = scalar_lea.hbm %s6, %s373
          %s376 = sshll.u32 %s374, 4
          %s377 = int_to_ptr.hbm [resolvable:$true] %s376
          %s378 = sshll.u32 [#allocation17], 4
          %s379 = int_to_ptr.vmem [resolvable:$true] %s378
          %381 = dma.hbm_to_vmem [thread:$0]  %s377, 128, %s379, [#allocation16]
        $region32: #{tpu_custom_call.1} parent=11 // pred_fallthru
          _
        // Predicated region
        $region33: #{tpu_custom_call.1} parent=11 // pred_check
          %p382 = pneg %p243
        $region34: #{tpu_custom_call.1} parent=11 // pred_check_branch
          %384 = sbr.rel (%p382) target = $region36
        $region35: #{tpu_custom_call.1} parent=11 // pred_region
          %386 = vsyncadd [#allocation19], 0
          %s387 = smul.addr %s39, 8
          %s388 = scalar_lea.hbm %s7, %s387
          %s390 = sshll.u32 %s388, 4
          %s391 = int_to_ptr.hbm [resolvable:$true] %s390
          %s392 = sshll.u32 [#allocation18], 4
          %s393 = int_to_ptr.vmem [resolvable:$true] %s392
          %395 = dma.hbm_to_vmem [thread:$0]  %s391, 128, %s393, [#allocation19]
        $region36: #{tpu_custom_call.1} parent=11 // pred_fallthru
          _
        // Predicated region
        $region37: #{tpu_custom_call.1} parent=11 // pred_check
          %p396 = pneg %p269
        $region38: #{tpu_custom_call.1} parent=11 // pred_check_branch
          %398 = sbr.rel (%p396) target = $region40
        $region39: #{tpu_custom_call.1} parent=11 // pred_region
          %400 = vsyncadd [#allocation19], 0
          %s401 = smul.addr %s39, 8
          %s402 = scalar_lea.hbm %s8, %s401
          %s404 = sshll.u32 %s402, 4
          %s405 = int_to_ptr.hbm [resolvable:$true] %s404
          %s406 = sshll.u32 [#allocation20], 4
          %s407 = int_to_ptr.vmem [resolvable:$true] %s406
          %409 = dma.hbm_to_vmem [thread:$0]  %s405, 128, %s407, [#allocation19]
        $region40: #{tpu_custom_call.1} parent=11 // pred_fallthru
          _
      $region12: #{tpu_custom_call.1} parent=5 // pred_fallthru
        _
      %p410 = scmp.lt.s32.totalorder %s27, 2
      // Predicated region
      $region41: #{tpu_custom_call.1} parent=5 // pred_check
        %p411 = pneg %p410
      $region42: #{tpu_custom_call.1} parent=5 // pred_check_branch
        %413 = sbr.rel (%p411) target = $region44
      $region43: #{tpu_custom_call.1} parent=5 // pred_region
        // Predicated region
        $region45: #{tpu_custom_call.1} parent=43 // pred_check
          %p414 = pneg %p68
        $region46: #{tpu_custom_call.1} parent=43 // pred_check_branch
          %416 = sbr.rel (%p414) target = $region48
        $region47: #{tpu_custom_call.1} parent=43 // pred_region
          %s417 = sand.u32 %s58, 1
          %s418 = scalar_lea.sflag [#allocation7], %s417
          %s419 = sand.u32 %s58, 1
          %s420 = smul.addr %s419, 4
          %s421 = scalar_lea.vmem [#allocation6], %s420
          %423 = vsyncadd %s418, 0
          %s424 = sadd.s32 %s35, %s34
          %s425 = smul.addr %s424, 4
          %s426 = scalar_lea.hbm %s0, %s425
          %s428 = sshll.u32 %s426, 4
          %s429 = int_to_ptr.hbm [resolvable:$true] %s428
          %s430 = sshll.u32 %s421, 4
          %s431 = int_to_ptr.vmem [resolvable:$true] %s430
          %433 = dma.hbm_to_vmem [thread:$0]  %s429, 64, %s431, %s418
        $region48: #{tpu_custom_call.1} parent=43 // pred_fallthru
          _
        // Predicated region
        $region49: #{tpu_custom_call.1} parent=43 // pred_check
          %p434 = pneg %p96
        $region50: #{tpu_custom_call.1} parent=43 // pred_check_branch
          %436 = sbr.rel (%p434) target = $region52
        $region51: #{tpu_custom_call.1} parent=43 // pred_region
          %s437 = sand.u32 %s27, 1
          %s438 = scalar_lea.sflag [#allocation10], %s437
          %s439 = sand.u32 %s86, 1
          %s440 = smul.addr %s439, 4
          %s441 = scalar_lea.vmem [#allocation9], %s440
          %443 = vsyncadd %s438, 0
          %s444 = sadd.s32 %s36, %s34
          %s445 = smul.addr %s444, 4
          %s446 = scalar_lea.hbm %s1, %s445
          %s448 = sshll.u32 %s446, 4
          %s449 = int_to_ptr.hbm [resolvable:$true] %s448
          %s450 = sshll.u32 %s441, 4
          %s451 = int_to_ptr.vmem [resolvable:$true] %s450
          %453 = dma.hbm_to_vmem [thread:$0]  %s449, 64, %s451, %s438
        $region52: #{tpu_custom_call.1} parent=43 // pred_fallthru
          _
      $region44: #{tpu_custom_call.1} parent=5 // pred_fallthru
        _
      %p454 = scmp.le.s32.totalorder 1, %s27
      %p455 = scmp.lt.s32.totalorder %s27, 3
      %p456 = pnand %p454, %p455
      %p457 = pneg %p456
      // Predicated region
      $region53: #{tpu_custom_call.1} parent=5 // pred_check
        _
      $region54: #{tpu_custom_call.1} parent=5 // pred_check_branch
        %459 = sbr.rel (%p456) target = $region56
      $region55: #{tpu_custom_call.1} parent=5 // pred_region
        %s460 = ssub.s32 %s27, 1
        %s461 = sand.u32 %s61, 1
        %s462 = scalar_lea.sflag [#allocation7], %s461
        %s463 = sand.u32 %s61, 1
        %s464 = smul.addr %s463, 4
        %s465 = scalar_lea.vmem [#allocation6], %s464
        // Predicated region
        $region57: #{tpu_custom_call.1} parent=55 // pred_check
          %p466 = pneg %p74
        $region58: #{tpu_custom_call.1} parent=55 // pred_check_branch
          %468 = sbr.rel (%p466) target = $region60
        $region59: #{tpu_custom_call.1} parent=55 // pred_region
          %470 = dma.done %s462, 64
        $region60: #{tpu_custom_call.1} parent=55 // pred_fallthru
          _
        %s471 = sand.u32 %s32, 1
        %s472 = scalar_lea.sflag [#allocation10], %s471
        %s473 = sand.u32 %s89, 1
        %s474 = smul.addr %s473, 4
        %s475 = scalar_lea.vmem [#allocation9], %s474
        // Predicated region
        $region61: #{tpu_custom_call.1} parent=55 // pred_check
          %p476 = pneg %p102
        $region62: #{tpu_custom_call.1} parent=55 // pred_check_branch
          %478 = sbr.rel (%p476) target = $region64
        $region63: #{tpu_custom_call.1} parent=55 // pred_region
          %480 = dma.done %s472, 64
        $region64: #{tpu_custom_call.1} parent=55 // pred_fallthru
          _
        // Predicated region
        $region65: #{tpu_custom_call.1} parent=55 // pred_check
          %p481 = pneg %p123
        $region66: #{tpu_custom_call.1} parent=55 // pred_check_branch
          %483 = sbr.rel (%p481) target = $region68
        $region67: #{tpu_custom_call.1} parent=55 // pred_region
          %485 = dma.done [#allocation10], 256
        $region68: #{tpu_custom_call.1} parent=55 // pred_fallthru
          _
        // Predicated region
        $region69: #{tpu_custom_call.1} parent=55 // pred_check
          %p486 = pneg %p144
        $region70: #{tpu_custom_call.1} parent=55 // pred_check_branch
          %488 = sbr.rel (%p486) target = $region72
        $region71: #{tpu_custom_call.1} parent=55 // pred_region
          %490 = dma.done [#allocation13], 256
        $region72: #{tpu_custom_call.1} parent=55 // pred_fallthru
          _
        // Predicated region
        $region73: #{tpu_custom_call.1} parent=55 // pred_check
          %p491 = pneg %p165
        $region74: #{tpu_custom_call.1} parent=55 // pred_check_branch
          %493 = sbr.rel (%p491) target = $region76
        $region75: #{tpu_custom_call.1} parent=55 // pred_region
          %495 = dma.done [#allocation13], 256
        $region76: #{tpu_custom_call.1} parent=55 // pred_fallthru
          _
        // Predicated region
        $region77: #{tpu_custom_call.1} parent=55 // pred_check
          %p496 = pneg %p191
        $region78: #{tpu_custom_call.1} parent=55 // pred_check_branch
          %498 = sbr.rel (%p496) target = $region80
        $region79: #{tpu_custom_call.1} parent=55 // pred_region
          %500 = dma.done [#allocation16], 128
        $region80: #{tpu_custom_call.1} parent=55 // pred_fallthru
          _
        // Predicated region
        $region81: #{tpu_custom_call.1} parent=55 // pred_check
          %p501 = pneg %p217
        $region82: #{tpu_custom_call.1} parent=55 // pred_check_branch
          %503 = sbr.rel (%p501) target = $region84
        $region83: #{tpu_custom_call.1} parent=55 // pred_region
          %505 = dma.done [#allocation16], 128
        $region84: #{tpu_custom_call.1} parent=55 // pred_fallthru
          _
        // Predicated region
        $region85: #{tpu_custom_call.1} parent=55 // pred_check
          %p506 = pneg %p243
        $region86: #{tpu_custom_call.1} parent=55 // pred_check_branch
          %508 = sbr.rel (%p506) target = $region88
        $region87: #{tpu_custom_call.1} parent=55 // pred_region
          %510 = dma.done [#allocation19], 128
        $region88: #{tpu_custom_call.1} parent=55 // pred_fallthru
          _
        // Predicated region
        $region89: #{tpu_custom_call.1} parent=55 // pred_check
          %p511 = pneg %p269
        $region90: #{tpu_custom_call.1} parent=55 // pred_check_branch
          %513 = sbr.rel (%p511) target = $region92
        $region91: #{tpu_custom_call.1} parent=55 // pred_region
          %515 = dma.done [#allocation19], 128
        $region92: #{tpu_custom_call.1} parent=55 // pred_fallthru
          _
        %s516 = sand.u32 %s61, 1
        %s517 = scalar_lea.sflag [#allocation7], %s516
        %s518 = sand.u32 %s61, 1
        %s519 = smul.addr %s518, 4
        %s520 = scalar_lea.vmem [#allocation6], %s519
        %p521 = pneg %p74
        %p522 = pneg %p71
        %s523 = sand.u32 %s32, 1
        %s524 = scalar_lea.sflag [#allocation10], %s523
        %s525 = sand.u32 %s89, 1
        %s526 = smul.addr %s525, 4
        %s527 = scalar_lea.vmem [#allocation9], %s526
        %p528 = pneg %p102
        %p529 = pneg %p99
        %p530 = pneg %p123
        %p531 = pneg %p120
        %p532 = pneg %p144
        %p533 = pneg %p141
        %p534 = pneg %p165
        %p535 = pneg %p162
        %p536 = pneg %p191
        %p537 = pneg %p188
        %p538 = pneg %p217
        %p539 = pneg %p214
        %p540 = pneg %p243
        %p541 = pneg %p240
        %p542 = pneg %p269
        %p543 = pneg %p266
        %p544 = pneg %p297
        %p545 = pneg %p294
        %s546 = sand.u32 %s284, 1
        %s547 = scalar_lea.sflag [#allocation8], %s546
        %s548 = sand.u32 %s284, 1
        %s549 = smul.addr %s548, 8
        %s550 = scalar_lea.vmem [#allocation21], %s549
        %p552 = scmp.eq.s32.totalorder %s39, 0
        // Predicated region
        $region93: #{tpu_custom_call.1} parent=55 // pred_check
          %p553 = pneg %p552
        $region94: #{tpu_custom_call.1} parent=55 // pred_check_branch
          %555 = sbr.rel (%p553) target = $region96
        $region95: #{tpu_custom_call.1} parent=55 // pred_region
          %v556 = vld [vmem:[%s465] sm:$0xf]
          %v557 = vld [vmem:[#allocation11] sm:$0xf]
          %v558 = vld [vmem:[#allocation11 + $0x4] sm:$0xf]
          %v559 = vld [vmem:[#allocation11 + $0x8] sm:$0xf]
          %v560 = vld [vmem:[#allocation11 + $0xc] sm:$0xf]
          %v565 = vunpack.c.l.b16 %v557
          %v566 = vunpack.c.l.b16 %v558
          %v567 = vunpack.c.l.b16 %v559
          %v568 = vunpack.c.l.b16 %v560
          %v569 = vpack.c.b16 %v566, %v565
          %v570 = vpack.c.b16 %v568, %v567
          %vm573 = vcmask 261120
          %v575 = vsel %vm573, %v556, 0
          %577 = vmatpush.bf16.msra.mxu0 0
          %578 = vmatpush.bf16.msra.mxu0 0
          %579 = vmatpush.bf16.msra.mxu0 0
          %580 = vmatpush.bf16.msra.mxu0 0
          %581 = vmatpush.bf16.msra.mxu0 0
          %582 = vmatpush.bf16.msra.mxu0 0
          %583 = vmatpush.bf16.msra.mxu0 %v570
          %584 = vmatpush.bf16.msra.mxu0 %v569
          %585 = vmatmul.bf16.gmra.mxu0 %v575
          %v586 = vpop.f32.mrf.mxu0
          %v587 = vadd.f32 0.0, %v586
          %v588 = vpop.f32.mrf.mxu0
          %589 = vdwg.mxu0
          %v590 = vld [vmem:[#allocation15] sm:$0xff]
          %v591 = vld [vmem:[#allocation17] sm:$0xff]
          %v592 = vmul.f32 %v587, %v590
          %594 = vrot.lane.b32.xlu0 %v587, 124
          %v595 = vpop.permute.xlu0 %594
          %597 = vrot.lane.b32.xlu0 %v587, 4
          %v598 = vpop.permute.xlu0 %597
          %vm600 = vcmask 31744
          %v601 = vsel %vm600, %v595, %v598
          %v602 = vmul.f32 %v601, %v591
          %v603 = vadd.f32 %v592, %v602
          %605 = vrot.lane.b32.xlu0 %v590, 8
          %v606 = vpop.permute.xlu0 %605
          %v608 = vmul.f32 %v587, %v606
          %609 = vrot.lane.b32.xlu0 %v587, 116
          %v610 = vpop.permute.xlu0 %609
          %v612 = vsel %vm600, %v610, %v595
          %v613 = vmul.f32 %v612, %v591
          %615 = vrot.lane.b32.xlu0 %v613, 8
          %v616 = vpop.permute.xlu0 %615
          %v618 = vadd.f32 %v608, %v616
          %619 = vrot.lane.b32.xlu0 %v590, 16
          %v620 = vpop.permute.xlu0 %619
          %v622 = vmul.f32 %v587, %v620
          %623 = vrot.lane.b32.xlu0 %v587, 108
          %v624 = vpop.permute.xlu0 %623
          %v626 = vsel %vm600, %v624, %v610
          %v627 = vmul.f32 %v626, %v591
          %629 = vrot.lane.b32.xlu0 %v627, 16
          %v630 = vpop.permute.xlu0 %629
          %v632 = vadd.f32 %v622, %v630
          %633 = vrot.lane.b32.xlu0 %v590, 24
          %v634 = vpop.permute.xlu0 %633
          %v636 = vmul.f32 %v587, %v634
          %637 = vrot.lane.b32.xlu0 %v587, 100
          %v638 = vpop.permute.xlu0 %637
          %v640 = vsel %vm600, %v638, %v624
          %v641 = vmul.f32 %v640, %v591
          %643 = vrot.lane.b32.xlu0 %v641, 24
          %v644 = vpop.permute.xlu0 %643
          %v646 = vadd.f32 %v636, %v644
          %vm647 = vcmask 64512
          %v648 = vsel %vm647, %v603, %v618
          %vm649 = vcmask 130048
          %v650 = vsel %vm649, %v648, %v632
          %vm651 = vcmask 195584
          %v652 = vsel %vm651, %v650, %v646
          %v653 = vpack.c.bf16 %v652, %v652
          %vm654 = vcmask 257024
          %655 = vst.msk [vmem:[#allocation2] sm:$0xf] %vm654, %v653
          %vm656 = vcmask 7168
          %657 = vst.msk [vmem:[#allocation4] sm:$0xff] %vm656, -1e+30
          %658 = vst.msk [vmem:[#allocation4 + $0x8] sm:$0xff] %vm656, -1e+30
          %659 = vst.msk [vmem:[#allocation4 + $0x10] sm:$0xff] %vm656, -1e+30
          %660 = vst.msk [vmem:[#allocation4 + $0x18] sm:$0xff] %vm656, -1e+30
          %661 = vst.msk [vmem:[#allocation5] sm:$0xff] %vm656, 0.0
          %662 = vst.msk [vmem:[#allocation5 + $0x8] sm:$0xff] %vm656, 0.0
          %663 = vst.msk [vmem:[#allocation5 + $0x10] sm:$0xff] %vm656, 0.0
          %664 = vst.msk [vmem:[#allocation5 + $0x18] sm:$0xff] %vm656, 0.0
          %665 = vst.msk [vmem:[#allocation3] sm:$0xff] %vm647, 0.0
          %666 = vst.msk [vmem:[#allocation3 + $0x8] sm:$0xff] %vm647, 0.0
          %667 = vst.msk [vmem:[#allocation3 + $0x10] sm:$0xff] %vm647, 0.0
          %668 = vst.msk [vmem:[#allocation3 + $0x18] sm:$0xff] %vm647, 0.0
        $region96: #{tpu_custom_call.1} parent=55 // pred_fallthru
          _
        %s669 = smul.u32 %s39, 8
        %s670 = smul.u32 %s38, 8
        %s671 = sadd.s32 %s670, 7
        %p672 = scmp.le.s32.totalorder %s669, %s671
        // Predicated region
        $region97: #{tpu_custom_call.1} parent=55 // pred_check
          %p673 = pneg %p672
        $region98: #{tpu_custom_call.1} parent=55 // pred_check_branch
          %675 = sbr.rel (%p673) target = $region100
        $region99: #{tpu_custom_call.1} parent=55 // pred_region
          %v676 = vld [vmem:[%s475] sm:$0xf]
          %v677 = vld [vmem:[#allocation12] sm:$0xf]
          %v678 = vld [vmem:[#allocation12 + $0x4] sm:$0xf]
          %v679 = vld [vmem:[#allocation12 + $0x8] sm:$0xf]
          %v680 = vld [vmem:[#allocation12 + $0xc] sm:$0xf]
          %v685 = vunpack.c.l.b16 %v677
          %v686 = vunpack.c.l.b16 %v678
          %v687 = vunpack.c.l.b16 %v679
          %v688 = vunpack.c.l.b16 %v680
          %v689 = vpack.c.b16 %v686, %v685
          %v690 = vpack.c.b16 %v688, %v687
          %vm693 = vcmask 261120
          %v695 = vsel %vm693, %v676, 0
          %697 = vmatpush.bf16.msra.mxu0 0
          %698 = vmatpush.bf16.msra.mxu0 0
          %699 = vmatpush.bf16.msra.mxu0 0
          %700 = vmatpush.bf16.msra.mxu0 0
          %701 = vmatpush.bf16.msra.mxu0 0
          %702 = vmatpush.bf16.msra.mxu0 0
          %703 = vmatpush.bf16.msra.mxu0 %v690
          %704 = vmatpush.bf16.msra.mxu0 %v689
          %705 = vmatmul.bf16.gmra.mxu0 %v695
          %v706 = vpop.f32.mrf.mxu0
          %v707 = vadd.f32 0.0, %v706
          %v708 = vpop.f32.mrf.mxu0
          %709 = vdwg.mxu0
          %v710 = vld [vmem:[#allocation18] sm:$0xff]
          %v711 = vld [vmem:[#allocation20] sm:$0xff]
          %v712 = vlaneseq
          %v713 = vshrl.u32 %v712, 7
          %v714 = vstv %s670
          %v715 = vadd.s32 %v714, %v713
          %v716 = vlaneseq
          %v717 = vand.u32 %v716, 127
          %v718 = vstv %s669
          %v719 = vadd.s32 %v718, %v717
          %vm720 = vcmp.ge.s32.totalorder %v715, %v719
          %v721 = vmul.f32 %v707, %v710
          %723 = vrot.lane.b32.xlu0 %v707, 124
          %v724 = vpop.permute.xlu0 %723
          %726 = vrot.lane.b32.xlu0 %v707, 4
          %v727 = vpop.permute.xlu0 %726
          %vm729 = vcmask 31744
          %v730 = vsel %vm729, %v724, %v727
          %v731 = vmul.f32 %v730, %v711
          %v732 = vadd.f32 %v721, %v731
          %v733 = vpack.c.bf16 %v732, %v732
          %v734 = vpack.c.bf16 %v707, %v707
          %v735 = vld [vmem:[#allocation2] sm:$0xf]
          %vm736 = vcmask 64512
          %v738 = vsel %vm736, %v735, 0
          %v741 = vsel %vm736, %v733, 0
          %743 = vmatpush.bf16.xpose.msra.mxu0 0
          %744 = vmatpush.bf16.xpose.msra.mxu0 0
          %745 = vmatpush.bf16.xpose.msra.mxu0 0
          %746 = vmatpush.bf16.xpose.msra.mxu0 0
          %747 = vmatpush.bf16.xpose.msra.mxu0 0
          %748 = vmatpush.bf16.xpose.msra.mxu0 0
          %749 = vmatpush.bf16.xpose.msra.mxu0 0
          %750 = vmatpush.bf16.xpose.msra.mxu0 %v741
          %751 = vmatmul.bf16.gmra.mxu0 %v738
          %v752 = vpop.f32.mrf.mxu0
          %v753 = vadd.f32 0.0, %v752
          %v754 = vpop.f32.mrf.mxu0
          %755 = vdwg.mxu0
          %v756 = vsel %vm720, %v753, -1e+30
          %v757 = vld [vmem:[#allocation4] sm:$0xff]
          %v758 = vsel %vm736, %v756, -inf
          %759 = vmax.xlane.f32.xlu0 %v758
          %v760 = vpop.xlane.xlu0 %759
          %v761 = vmax.f32 %v757, %v760
          %v762 = vsub.f32 %v757, %v761
          %v763 = vmul.f32 %v762, 1.442695
          %v764 = vpow.pop %v763
          %766 = vset.pattern.permute.xlu0 0
          %767 = vperm.xlu0 %766, %v761
          %v768 = vpop.permute.xlu0 %767
          %v770 = vsub.f32 %v756, %v768
          %v771 = vmul.f32 %v770, 1.442695
          %v772 = vpow.pop %v771
          %v773 = vld [vmem:[#allocation5] sm:$0xff]
          %v774 = vmul.f32 %v764, %v773
          %v775 = vsel %vm736, %v772, 0.0
          %776 = vadd.xlane.f32.xlu0 %v775
          %v777 = vpop.xlane.xlu0 %776
          %v778 = vadd.f32 %v774, %v777
          %vm779 = vcmask 7168
          %780 = vst.msk [vmem:[#allocation5] sm:$0xff] %vm779, %v778
          %v781 = vld [vmem:[#allocation3] sm:$0xff]
          %783 = vset.pattern.permute.xlu0 0
          %784 = vperm.xlu0 %783, %v764
          %v785 = vpop.permute.xlu0 %784
          %v787 = vmul.f32 %v785, %v781
          %v788 = vpack.c.bf16 %v772, %v772
          %790 = vrot.lane.b32.xlu0 %v734, 96
          %v791 = vpop.permute.xlu0 %790
          %v793 = vsel %vm736, %v788, 0
          %vm795 = vcmask 1043456
          %v797 = vsel %vm795, %v791, 0
          %799 = vmatpush.bf16.msra.mxu0 0
          %800 = vmatpush.bf16.msra.mxu0 0
          %801 = vmatpush.bf16.msra.mxu0 0
          %802 = vmatpush.bf16.msra.mxu0 0
          %803 = vmatpush.bf16.msra.mxu0 0
          %804 = vmatpush.bf16.msra.mxu0 0
          %805 = vmatpush.bf16.msra.mxu0 0
          %806 = vmatpush.bf16.msra.mxu0 %v797
          %807 = vmatmul.bf16.gmra.mxu0 %v793
          %v808 = vpop.f32.mrf.mxu0
          %v809 = vadd.f32 0.0, %v808
          %v810 = vpop.f32.mrf.mxu0
          %811 = vdwg.mxu0
          %v812 = vadd.f32 %v787, %v809
          %813 = vst.msk [vmem:[#allocation3] sm:$0xff] %vm736, %v812
          %814 = vst.msk [vmem:[#allocation4] sm:$0xff] %vm779, %v761
          %816 = vrot.lane.b32.xlu0 %v710, 8
          %v817 = vpop.permute.xlu0 %816
          %v819 = vmul.f32 %v707, %v817
          %820 = vrot.lane.b32.xlu0 %v707, 116
          %v821 = vpop.permute.xlu0 %820
          %v823 = vsel %vm729, %v821, %v724
          %v824 = vmul.f32 %v823, %v711
          %826 = vrot.lane.b32.xlu0 %v824, 8
          %v827 = vpop.permute.xlu0 %826
          %v829 = vadd.f32 %v819, %v827
          %v830 = vpack.c.bf16 %v829, %v829
          %v831 = vld [vmem:[#allocation2] sm:$0xf]
          %v833 = vunpack.c.l.b16 %v831
          %v834 = vpack.c.b16 %v833, %v833
          %835 = vrot.lane.b32.xlu0 %v834, 120
          %v836 = vpop.permute.xlu0 %835
          %838 = vrot.lane.b32.xlu0 %v830, 120
          %v839 = vpop.permute.xlu0 %838
          %v841 = vsel %vm736, %v836, 0
          %v844 = vsel %vm736, %v839, 0
          %846 = vmatpush.bf16.xpose.msra.mxu0 0
          %847 = vmatpush.bf16.xpose.msra.mxu0 0
          %848 = vmatpush.bf16.xpose.msra.mxu0 0
          %849 = vmatpush.bf16.xpose.msra.mxu0 0
          %850 = vmatpush.bf16.xpose.msra.mxu0 0
          %851 = vmatpush.bf16.xpose.msra.mxu0 0
          %852 = vmatpush.bf16.xpose.msra.mxu0 0
          %853 = vmatpush.bf16.xpose.msra.mxu0 %v844
          %854 = vmatmul.bf16.gmra.mxu0 %v841
          %v855 = vpop.f32.mrf.mxu0
          %v856 = vadd.f32 0.0, %v855
          %v857 = vpop.f32.mrf.mxu0
          %858 = vdwg.mxu0
          %v859 = vsel %vm720, %v856, -1e+30
          %s860 = scalar_lea.vmem [#allocation4], 8
          %v861 = vld [vmem:[%s860] sm:$0xff]
          %v862 = vsel %vm736, %v859, -inf
          %863 = vmax.xlane.f32.xlu0 %v862
          %v864 = vpop.xlane.xlu0 %863
          %v865 = vmax.f32 %v861, %v864
          %v866 = vsub.f32 %v861, %v865
          %v867 = vmul.f32 %v866, 1.442695
          %v868 = vpow.pop %v867
          %870 = vset.pattern.permute.xlu0 0
          %871 = vperm.xlu0 %870, %v865
          %v872 = vpop.permute.xlu0 %871
          %v874 = vsub.f32 %v859, %v872
          %v875 = vmul.f32 %v874, 1.442695
          %v876 = vpow.pop %v875
          %s877 = scalar_lea.vmem [#allocation5], 8
          %v878 = vld [vmem:[%s877] sm:$0xff]
          %v879 = vmul.f32 %v868, %v878
          %v880 = vsel %vm736, %v876, 0.0
          %881 = vadd.xlane.f32.xlu0 %v880
          %v882 = vpop.xlane.xlu0 %881
          %v883 = vadd.f32 %v879, %v882
          %884 = vst.msk [vmem:[%s877] sm:$0xff] %vm779, %v883
          %s885 = scalar_lea.vmem [#allocation3], 8
          %v886 = vld [vmem:[%s885] sm:$0xff]
          %888 = vset.pattern.permute.xlu0 0
          %889 = vperm.xlu0 %888, %v868
          %v890 = vpop.permute.xlu0 %889
          %v892 = vmul.f32 %v890, %v886
          %v893 = vpack.c.bf16 %v876, %v876
          %894 = vrot.lane.b32.xlu0 %v734, 88
          %v895 = vpop.permute.xlu0 %894
          %v897 = vsel %vm736, %v893, 0
          %v900 = vsel %vm795, %v895, 0
          %902 = vmatpush.bf16.msra.mxu0 0
          %903 = vmatpush.bf16.msra.mxu0 0
          %904 = vmatpush.bf16.msra.mxu0 0
          %905 = vmatpush.bf16.msra.mxu0 0
          %906 = vmatpush.bf16.msra.mxu0 0
          %907 = vmatpush.bf16.msra.mxu0 0
          %908 = vmatpush.bf16.msra.mxu0 0
          %909 = vmatpush.bf16.msra.mxu0 %v900
          %910 = vmatmul.bf16.gmra.mxu0 %v897
          %v911 = vpop.f32.mrf.mxu0
          %v912 = vadd.f32 0.0, %v911
          %v913 = vpop.f32.mrf.mxu0
          %914 = vdwg.mxu0
          %v915 = vadd.f32 %v892, %v912
          %916 = vst.msk [vmem:[%s885] sm:$0xff] %vm736, %v915
          %917 = vst.msk [vmem:[%s860] sm:$0xff] %vm779, %v865
          %918 = vrot.lane.b32.xlu0 %v710, 16
          %v919 = vpop.permute.xlu0 %918
          %v921 = vmul.f32 %v707, %v919
          %922 = vrot.lane.b32.xlu0 %v707, 108
          %v923 = vpop.permute.xlu0 %922
          %v925 = vsel %vm729, %v923, %v821
          %v926 = vmul.f32 %v925, %v711
          %928 = vrot.lane.b32.xlu0 %v926, 16
          %v929 = vpop.permute.xlu0 %928
          %v931 = vadd.f32 %v921, %v929
          %v932 = vpack.c.bf16 %v931, %v931
          %v933 = vld [vmem:[#allocation2] sm:$0xf]
          %v935 = vunpack.c.l.b16 %v933
          %v936 = vpack.c.b16 %v935, %v935
          %937 = vrot.lane.b32.xlu0 %v936, 112
          %v938 = vpop.permute.xlu0 %937
          %940 = vrot.lane.b32.xlu0 %v932, 112
          %v941 = vpop.permute.xlu0 %940
          %v943 = vsel %vm736, %v938, 0
          %v946 = vsel %vm736, %v941, 0
          %948 = vmatpush.bf16.xpose.msra.mxu0 0
          %949 = vmatpush.bf16.xpose.msra.mxu0 0
          %950 = vmatpush.bf16.xpose.msra.mxu0 0
          %951 = vmatpush.bf16.xpose.msra.mxu0 0
          %952 = vmatpush.bf16.xpose.msra.mxu0 0
          %953 = vmatpush.bf16.xpose.msra.mxu0 0
          %954 = vmatpush.bf16.xpose.msra.mxu0 0
          %955 = vmatpush.bf16.xpose.msra.mxu0 %v946
          %956 = vmatmul.bf16.gmra.mxu0 %v943
          %v957 = vpop.f32.mrf.mxu0
          %v958 = vadd.f32 0.0, %v957
          %v959 = vpop.f32.mrf.mxu0
          %960 = vdwg.mxu0
          %v961 = vsel %vm720, %v958, -1e+30
          %s962 = scalar_lea.vmem [#allocation4], 16
          %v963 = vld [vmem:[%s962] sm:$0xff]
          %v964 = vsel %vm736, %v961, -inf
          %965 = vmax.xlane.f32.xlu0 %v964
          %v966 = vpop.xlane.xlu0 %965
          %v967 = vmax.f32 %v963, %v966
          %v968 = vsub.f32 %v963, %v967
          %v969 = vmul.f32 %v968, 1.442695
          %v970 = vpow.pop %v969
          %972 = vset.pattern.permute.xlu0 0
          %973 = vperm.xlu0 %972, %v967
          %v974 = vpop.permute.xlu0 %973
          %v976 = vsub.f32 %v961, %v974
          %v977 = vmul.f32 %v976, 1.442695
          %v978 = vpow.pop %v977
          %s979 = scalar_lea.vmem [#allocation5], 16
          %v980 = vld [vmem:[%s979] sm:$0xff]
          %v981 = vmul.f32 %v970, %v980
          %v982 = vsel %vm736, %v978, 0.0
          %983 = vadd.xlane.f32.xlu0 %v982
          %v984 = vpop.xlane.xlu0 %983
          %v985 = vadd.f32 %v981, %v984
          %986 = vst.msk [vmem:[%s979] sm:$0xff] %vm779, %v985
          %s987 = scalar_lea.vmem [#allocation3], 16
          %v988 = vld [vmem:[%s987] sm:$0xff]
          %990 = vset.pattern.permute.xlu0 0
          %991 = vperm.xlu0 %990, %v970
          %v992 = vpop.permute.xlu0 %991
          %v994 = vmul.f32 %v992, %v988
          %v995 = vpack.c.bf16 %v978, %v978
          %996 = vrot.lane.b32.xlu0 %v734, 80
          %v997 = vpop.permute.xlu0 %996
          %v999 = vsel %vm736, %v995, 0
          %v1002 = vsel %vm795, %v997, 0
          %1004 = vmatpush.bf16.msra.mxu0 0
          %1005 = vmatpush.bf16.msra.mxu0 0
          %1006 = vmatpush.bf16.msra.mxu0 0
          %1007 = vmatpush.bf16.msra.mxu0 0
          %1008 = vmatpush.bf16.msra.mxu0 0
          %1009 = vmatpush.bf16.msra.mxu0 0
          %1010 = vmatpush.bf16.msra.mxu0 0
          %1011 = vmatpush.bf16.msra.mxu0 %v1002
          %1012 = vmatmul.bf16.gmra.mxu0 %v999
          %v1013 = vpop.f32.mrf.mxu0
          %v1014 = vadd.f32 0.0, %v1013
          %v1015 = vpop.f32.mrf.mxu0
          %1016 = vdwg.mxu0
          %v1017 = vadd.f32 %v994, %v1014
          %1018 = vst.msk [vmem:[%s987] sm:$0xff] %vm736, %v1017
          %1019 = vst.msk [vmem:[%s962] sm:$0xff] %vm779, %v967
          %1020 = vrot.lane.b32.xlu0 %v710, 24
          %v1021 = vpop.permute.xlu0 %1020
          %v1023 = vmul.f32 %v707, %v1021
          %1024 = vrot.lane.b32.xlu0 %v707, 100
          %v1025 = vpop.permute.xlu0 %1024
          %v1027 = vsel %vm729, %v1025, %v923
          %v1028 = vmul.f32 %v1027, %v711
          %1030 = vrot.lane.b32.xlu0 %v1028, 24
          %v1031 = vpop.permute.xlu0 %1030
          %v1033 = vadd.f32 %v1023, %v1031
          %v1034 = vpack.c.bf16 %v1033, %v1033
          %v1035 = vld [vmem:[#allocation2] sm:$0xf]
          %v1037 = vunpack.c.l.b16 %v1035
          %v1038 = vpack.c.b16 %v1037, %v1037
          %1039 = vrot.lane.b32.xlu0 %v1038, 104
          %v1040 = vpop.permute.xlu0 %1039
          %1042 = vrot.lane.b32.xlu0 %v1034, 104
          %v1043 = vpop.permute.xlu0 %1042
          %v1045 = vsel %vm736, %v1040, 0
          %v1048 = vsel %vm736, %v1043, 0
          %1050 = vmatpush.bf16.xpose.msra.mxu0 0
          %1051 = vmatpush.bf16.xpose.msra.mxu0 0
          %1052 = vmatpush.bf16.xpose.msra.mxu0 0
          %1053 = vmatpush.bf16.xpose.msra.mxu0 0
          %1054 = vmatpush.bf16.xpose.msra.mxu0 0
          %1055 = vmatpush.bf16.xpose.msra.mxu0 0
          %1056 = vmatpush.bf16.xpose.msra.mxu0 0
          %1057 = vmatpush.bf16.xpose.msra.mxu0 %v1048
          %1058 = vmatmul.bf16.gmra.mxu0 %v1045
          %v1059 = vpop.f32.mrf.mxu0
          %v1060 = vadd.f32 0.0, %v1059
          %v1061 = vpop.f32.mrf.mxu0
          %1062 = vdwg.mxu0
          %v1063 = vsel %vm720, %v1060, -1e+30
          %s1064 = scalar_lea.vmem [#allocation4], 24
          %v1065 = vld [vmem:[%s1064] sm:$0xff]
          %v1066 = vsel %vm736, %v1063, -inf
          %1067 = vmax.xlane.f32.xlu0 %v1066
          %v1068 = vpop.xlane.xlu0 %1067
          %v1069 = vmax.f32 %v1065, %v1068
          %v1070 = vsub.f32 %v1065, %v1069
          %v1071 = vmul.f32 %v1070, 1.442695
          %v1072 = vpow.pop %v1071
          %1074 = vset.pattern.permute.xlu0 0
          %1075 = vperm.xlu0 %1074, %v1069
          %v1076 = vpop.permute.xlu0 %1075
          %v1078 = vsub.f32 %v1063, %v1076
          %v1079 = vmul.f32 %v1078, 1.442695
          %v1080 = vpow.pop %v1079
          %s1081 = scalar_lea.vmem [#allocation5], 24
          %v1082 = vld [vmem:[%s1081] sm:$0xff]
          %v1083 = vmul.f32 %v1072, %v1082
          %v1084 = vsel %vm736, %v1080, 0.0
          %1085 = vadd.xlane.f32.xlu0 %v1084
          %v1086 = vpop.xlane.xlu0 %1085
          %v1087 = vadd.f32 %v1083, %v1086
          %1088 = vst.msk [vmem:[%s1081] sm:$0xff] %vm779, %v1087
          %s1089 = scalar_lea.vmem [#allocation3], 24
          %v1090 = vld [vmem:[%s1089] sm:$0xff]
          %1092 = vset.pattern.permute.xlu0 0
          %1093 = vperm.xlu0 %1092, %v1072
          %v1094 = vpop.permute.xlu0 %1093
          %v1096 = vmul.f32 %v1094, %v1090
          %v1097 = vpack.c.bf16 %v1080, %v1080
          %1098 = vrot.lane.b32.xlu0 %v734, 72
          %v1099 = vpop.permute.xlu0 %1098
          %v1101 = vsel %vm736, %v1097, 0
          %v1104 = vsel %vm795, %v1099, 0
          %1106 = vmatpush.bf16.msra.mxu0 0
          %1107 = vmatpush.bf16.msra.mxu0 0
          %1108 = vmatpush.bf16.msra.mxu0 0
          %1109 = vmatpush.bf16.msra.mxu0 0
          %1110 = vmatpush.bf16.msra.mxu0 0
          %1111 = vmatpush.bf16.msra.mxu0 0
          %1112 = vmatpush.bf16.msra.mxu0 0
          %1113 = vmatpush.bf16.msra.mxu0 %v1104
          %1114 = vmatmul.bf16.gmra.mxu0 %v1101
          %v1115 = vpop.f32.mrf.mxu0
          %v1116 = vadd.f32 0.0, %v1115
          %v1117 = vpop.f32.mrf.mxu0
          %1118 = vdwg.mxu0
          %v1119 = vadd.f32 %v1096, %v1116
          %1120 = vst.msk [vmem:[%s1089] sm:$0xff] %vm736, %v1119
          %1121 = vst.msk [vmem:[%s1064] sm:$0xff] %vm779, %v1069
        $region100: #{tpu_custom_call.1} parent=55 // pred_fallthru
          _
        // Predicated region
        $region101: #{tpu_custom_call.1} parent=55 // pred_check
          %p1122 = pneg %p552
        $region102: #{tpu_custom_call.1} parent=55 // pred_check_branch
          %1124 = sbr.rel (%p1122) target = $region104
        $region103: #{tpu_custom_call.1} parent=55 // pred_region
          %v1125 = vld [vmem:[#allocation3] sm:$0xff]
          %v1126 = vld [vmem:[#allocation5] sm:$0xff]
          %v1127 = vrcp.pop %v1126
          %1129 = vset.pattern.permute.xlu0 0
          %1130 = vperm.xlu0 %1129, %v1127
          %v1131 = vpop.permute.xlu0 %1130
          %v1133 = vmul.f32 %v1125, %v1131
          %s1134 = scalar_lea.vmem [#allocation3], 8
          %v1135 = vld [vmem:[%s1134] sm:$0xff]
          %s1136 = scalar_lea.vmem [#allocation5], 8
          %v1137 = vld [vmem:[%s1136] sm:$0xff]
          %v1138 = vrcp.pop %v1137
          %1140 = vset.pattern.permute.xlu0 0
          %1141 = vperm.xlu0 %1140, %v1138
          %v1142 = vpop.permute.xlu0 %1141
          %v1144 = vmul.f32 %v1135, %v1142
          %s1145 = scalar_lea.vmem [#allocation3], 16
          %v1146 = vld [vmem:[%s1145] sm:$0xff]
          %s1147 = scalar_lea.vmem [#allocation5], 16
          %v1148 = vld [vmem:[%s1147] sm:$0xff]
          %v1149 = vrcp.pop %v1148
          %1151 = vset.pattern.permute.xlu0 0
          %1152 = vperm.xlu0 %1151, %v1149
          %v1153 = vpop.permute.xlu0 %1152
          %v1155 = vmul.f32 %v1146, %v1153
          %s1156 = scalar_lea.vmem [#allocation3], 24
          %v1157 = vld [vmem:[%s1156] sm:$0xff]
          %s1158 = scalar_lea.vmem [#allocation5], 24
          %v1159 = vld [vmem:[%s1158] sm:$0xff]
          %v1160 = vrcp.pop %v1159
          %1162 = vset.pattern.permute.xlu0 0
          %1163 = vperm.xlu0 %1162, %v1160
          %v1164 = vpop.permute.xlu0 %1163
          %v1166 = vmul.f32 %v1157, %v1164
          %1168 = vrot.lane.b32.xlu0 %v1144, 8
          %v1169 = vpop.permute.xlu0 %1168
          %1172 = vrot.lane.b32.xlu0 %v1155, 16
          %v1173 = vpop.permute.xlu0 %1172
          %1176 = vrot.lane.b32.xlu0 %v1166, 24
          %v1177 = vpop.permute.xlu0 %1176
          %vm1179 = vcmask 64512
          %v1180 = vsel %vm1179, %v1133, %v1169
          %vm1181 = vcmask 130048
          %v1182 = vsel %vm1181, %v1180, %v1173
          %vm1183 = vcmask 195584
          %v1184 = vsel %vm1183, %v1182, %v1177
          %v1185 = vpack.c.bf16 %v1184, %v1184
          %v1186 = vld [vmem:[#allocation14] sm:$0xf]
          %v1187 = vld [vmem:[#allocation14 + $0x4] sm:$0xf]
          %v1188 = vld [vmem:[#allocation14 + $0x8] sm:$0xf]
          %v1189 = vld [vmem:[#allocation14 + $0xc] sm:$0xf]
          %v1194 = vunpack.c.l.b16 %v1186
          %v1195 = vunpack.c.l.b16 %v1187
          %v1196 = vunpack.c.l.b16 %v1188
          %v1197 = vunpack.c.l.b16 %v1189
          %v1198 = vpack.c.b16 %v1195, %v1194
          %v1199 = vpack.c.b16 %v1197, %v1196
          %vm1202 = vcmask 261120
          %v1204 = vsel %vm1202, %v1185, 0
          %1206 = vmatpush.bf16.msra.mxu0 0
          %1207 = vmatpush.bf16.msra.mxu0 0
          %1208 = vmatpush.bf16.msra.mxu0 0
          %1209 = vmatpush.bf16.msra.mxu0 0
          %1210 = vmatpush.bf16.msra.mxu0 0
          %1211 = vmatpush.bf16.msra.mxu0 0
          %1212 = vmatpush.bf16.msra.mxu0 %v1199
          %1213 = vmatpush.bf16.msra.mxu0 %v1198
          %1214 = vmatmul.bf16.gmra.mxu0 %v1204
          %v1215 = vpop.f32.mrf.mxu0
          %v1216 = vadd.f32 0.0, %v1215
          %v1217 = vpop.f32.mrf.mxu0
          %1218 = vdwg.mxu0
          %1219 = vst.msk [vmem:[%s550] sm:$0xff] %vm1202, %v1216
        $region104: #{tpu_custom_call.1} parent=55 // pred_fallthru
          _
        %s1220 = sand.u32 %s284, 1
        %s1221 = scalar_lea.sflag [#allocation8], %s1220
        %s1222 = sand.u32 %s284, 1
        %s1223 = smul.addr %s1222, 8
        %s1224 = scalar_lea.vmem [#allocation21], %s1223
        // Predicated region
        $region105: #{tpu_custom_call.1} parent=55 // pred_check
          %p1225 = pneg %p294
        $region106: #{tpu_custom_call.1} parent=55 // pred_check_branch
          %1227 = sbr.rel (%p1225) target = $region108
        $region107: #{tpu_custom_call.1} parent=55 // pred_region
          %1229 = vsyncadd %s1221, 0
          %s1230 = sadd.s32 %s38, %s37
          %s1231 = smul.addr %s1230, 8
          %s1232 = scalar_lea.hbm %s9, %s1231
          %s1234 = sshll.u32 %s1224, 4
          %s1235 = int_to_ptr.vmem [resolvable:$true] %s1234
          %s1236 = sshll.u32 %s1232, 4
          %s1237 = int_to_ptr.hbm [resolvable:$true] %s1236
          %1239 = dma.vmem_to_hbm [thread:$0]  %s1235, 128, %s1237, %s1221
        $region108: #{tpu_custom_call.1} parent=55 // pred_fallthru
          _
      $region56: #{tpu_custom_call.1} parent=5 // pred_fallthru
        _
      %p1240 = scmp.le.s32.totalorder 2, %s27
      // Predicated region
      $region109: #{tpu_custom_call.1} parent=5 // pred_check
        %p1241 = pneg %p1240
      $region110: #{tpu_custom_call.1} parent=5 // pred_check_branch
        %1243 = sbr.rel (%p1241) target = $region112
      $region111: #{tpu_custom_call.1} parent=5 // pred_region
        %s1244 = ssub.s32 %s27, 2
        // Predicated region
        $region113: #{tpu_custom_call.1} parent=111 // pred_check
          %p1245 = pneg %p300
        $region114: #{tpu_custom_call.1} parent=111 // pred_check_branch
          %1247 = sbr.rel (%p1245) target = $region116
        $region115: #{tpu_custom_call.1} parent=111 // pred_region
          %s1248 = sand.u32 %s285, 1
          %s1249 = scalar_lea.sflag [#allocation8], %s1248
          %s1250 = sand.u32 %s285, 1
          %s1251 = smul.addr %s1250, 8
          %s1252 = scalar_lea.vmem [#allocation21], %s1251
          %1254 = dma.done %s1249, 128
        $region116: #{tpu_custom_call.1} parent=111 // pred_fallthru
          _
      $region112: #{tpu_custom_call.1} parent=5 // pred_fallthru
        _
    $region6: #{tpu_custom_call.1} parent=1 // loop_footer
      %s31 = sadd.s32 1, %s27
    $region7: #{tpu_custom_call.1} parent=1 // loop_footer_branch
      %26 = sbr.rel target = $region3
    $region8: #{tpu_custom_call.1} parent=1 // loop_exit
      _
    %1255 = vsyncpa [#allocation7], 1
    %s1256 = scalar_lea.sflag [#allocation7], 1
    %1257 = vsyncpa %s1256, 1
    %1258 = vsyncpa [#allocation10], 1
    %s1259 = scalar_lea.sflag [#allocation10], 1
    %1260 = vsyncpa %s1259, 1
    %1261 = vsyncpa [#allocation13], 1
    %1262 = vsyncpa [#allocation16], 1
    %1263 = vsyncpa [#allocation19], 1
    %1264 = vsyncpa [#allocation8], 1
    %s1265 = scalar_lea.sflag [#allocation8], 1
    %1266 = vsyncpa %s1265, 1

</llo_original>
